<compile_context>
chip_gen: v6e
topology: v6e:2x2x1
jax: 0.10.0
libtpu: 0.0.40
codegen_flags: <defaults>
</compile_context>

<pallas_src>
from functools import partial

import jax
import jax.numpy as jnp
from jax import lax
from jax.experimental import pallas as pl
from jax.experimental.pallas import tpu as pltpu

EPS = 1e-5  # nn.InstanceNorm2d default eps


# ----------------------------- kernel helpers ------------------------------
def _instance_norm(y, inv_hw):
    # y: (C, HW) f32. Two-pass mean/var (biased; no affine: PyTorch defaults).
    mu = jnp.sum(y, axis=1, keepdims=True) * inv_hw
    d = y - mu
    var = jnp.sum(d * d, axis=1, keepdims=True) * inv_hw
    return d * lax.rsqrt(var + EPS)


# --------------------------------- kernel ----------------------------------
def residual_block_kernel(x_ref, idx_ref, w1_ref, w2_ref, o_ref, patches_ref,
                          *, H, W, compute_dtype):
    bb, C, HW = x_ref.shape
    inv_hw = jnp.float32(1.0 / HW)

    w1 = w1_ref[...]          # (C, 9C); biases dropped (cancel under InstanceNorm)
    w2 = w2_ref[...]

    # Static border masks, hoisted once; built from precomputed (col,row) ids so
    # no in-kernel integer div/mod is needed. Comparisons happen at (C, HW).
    colc = jnp.broadcast_to(idx_ref[0:1, :], (C, HW))
    rowc = jnp.broadcast_to(idx_ref[1:2, :], (C, HW))
    at_left, at_right = colc == 0, colc == W - 1
    at_top, at_bot = rowc == 0, rowc == H - 1

    def fill_patches(a):
        # a: (C, HW) compute_dtype. Writes the 9 reflected 3x3 taps into
        # patches_ref in (ky, kx) row-major order matching the packed weights.
        # Shifts ride the XLU (pltpu.roll); reflection is a lane-masked select.
        left = pltpu.roll(a, shift=1, axis=1)         # value of (i, j-1)
        right = pltpu.roll(a, shift=HW - 1, axis=1)   # value of (i, j+1)
        cols = (jnp.where(at_left, right, left),      # dx = -1 (reflected)
                a,                                    # dx =  0
                jnp.where(at_right, left, right))     # dx = +1 (reflected)
        for kx, c in enumerate(cols):
            up = pltpu.roll(c, shift=W, axis=1)          # value of (i-1, .)
            down = pltpu.roll(c, shift=HW - W, axis=1)   # value of (i+1, .)
            rows = (jnp.where(at_top, down, up),      # dy = -1 (reflected)
                    c,                                # dy =  0
                    jnp.where(at_bot, up, down))      # dy = +1 (reflected)
            for ky, tap in enumerate(rows):
                k = ky * 3 + kx
                patches_ref[k * C:(k + 1) * C, :] = tap

    def conv3x3(a, w_packed):
        # One fused K=9C MXU matmul per conv with f32 accumulation.
        fill_patches(a)
        return jnp.dot(w_packed, patches_ref[...],
                       preferred_element_type=jnp.float32)   # (C, HW) f32

    for b in range(bb):   # static batch block; scratch & weights reused
        x = x_ref[b]                                          # (C, HW) residual
        a = x.astype(compute_dtype)
        h = jnp.maximum(_instance_norm(conv3x3(a, w1), inv_hw), 0.0)
        h = _instance_norm(conv3x3(h.astype(compute_dtype), w2), inv_hw)
        # residual add on the lane-dense (C, HW) layout -> unmasked stores
        o_ref[b] = (x.astype(jnp.float32) + h).astype(o_ref.dtype)


# -------------------------------- wrapper ----------------------------------
def residual_block(x, w1, b1, w2, b2, *, compute_dtype=jnp.float32,
                   batch_block=1):
    """x: (N, C, H, W); w*: (C, C, 3, 3); b*: (C,). Returns (N, C, H, W).

    Conv biases are intentionally unused: InstanceNorm2d (affine=False) removes
    the per-channel mean, so b1/b2 cancel exactly in the reference module.
    """
    N, C, H, W = x.shape
    HW = H * W
    bb = batch_block
    assert N % bb == 0, "batch_block must divide the batch size"
    del b1, b2  # cancel exactly under InstanceNorm (affine=False)

    def pack(w):
        # (Cout, Cin, ky, kx) -> (Cout, ky, kx, Cin) -> (Cout, 9*Cin)
        return jnp.transpose(w, (0, 2, 3, 1)).reshape(C, 9 * C).astype(compute_dtype)

    w1_p, w2_p = pack(w1), pack(w2)

    x_flat = x.reshape(N, C, HW)                      # lane-dense activations
    # Static per-pixel (col, row) indices for the in-kernel reflection masks.
    pix = jnp.arange(HW, dtype=jnp.int32)
    idx = jnp.stack([pix % W, pix // W])              # (2, HW) int32

    kernel = partial(residual_block_kernel, H=H, W=W,
                     compute_dtype=compute_dtype)

    itemsize = jnp.dtype(x.dtype).itemsize
    w_itemsize = jnp.dtype(compute_dtype).itemsize
    cost = pl.CostEstimate(
        flops=int(2 * 2 * N * C * 9 * C * HW),
        transcendentals=int(2 * N * C),
        bytes_accessed=int(itemsize * 2 * N * C * HW
                           + w_itemsize * 2 * C * 9 * C
                           + 4 * 2 * HW),
    )

    out_flat = pl.pallas_call(
        kernel,
        out_shape=jax.ShapeDtypeStruct((N, C, HW), x.dtype),
        grid_spec=pltpu.PrefetchScalarGridSpec(
            num_scalar_prefetch=0,
            grid=(N // bb,),
            in_specs=[
                pl.BlockSpec((bb, C, HW), lambda n: (n, 0, 0)),
                pl.BlockSpec((2, HW), lambda n: (0, 0)),
                pl.BlockSpec((C, 9 * C), lambda n: (0, 0)),
                pl.BlockSpec((C, 9 * C), lambda n: (0, 0)),
            ],
            out_specs=pl.BlockSpec((bb, C, HW), lambda n: (n, 0, 0)),
            scratch_shapes=[pltpu.VMEM((9 * C, HW), compute_dtype)],
        ),
        compiler_params=pltpu.CompilerParams(
            dimension_semantics=("parallel",),
        ),
        cost_estimate=cost,
    )(x_flat, idx, w1_p, w2_p)

    return out_flat.reshape(N, C, H, W)


# ------------------------------ pure-JAX ref --------------------------------
def residual_block_ref(x, w1, b1, w2, b2):
    def pad(z):
        return jnp.pad(z, ((0, 0), (0, 0), (1, 1), (1, 1)), mode="reflect")

    def conv(z, w, b):
        y = lax.conv_general_dilated(
            z, w, (1, 1), "VALID", dimension_numbers=("NCHW", "OIHW", "NCHW")
        )
        return y + b[None, :, None, None]

    def inorm(z):
        mu = jnp.mean(z, axis=(2, 3), keepdims=True)
        var = jnp.mean(jnp.square(z - mu), axis=(2, 3), keepdims=True)
        return (z - mu) * lax.rsqrt(var + EPS)

    h = inorm(conv(pad(x), w1, b1))
    h = jnp.maximum(h, 0.0)
    h = inorm(conv(pad(h), w2, b2))
    return x + h


# --------------------------------- main -------------------------------------
if __name__ == "__main__":
    N, C, H, W = 2, 4, 16, 16

    key = jax.random.PRNGKey(0)
    kx, kw1, kb1, kw2, kb2 = jax.random.split(key, 5)

    x = jax.random.normal(kx, (N, C, H, W), dtype=jnp.float32)

    # Deterministic conv params, PyTorch-default-ish scale: U(-1/sqrt(fan_in), +)
    fan_in = C * 3 * 3
    bound = 1.0 / (fan_in ** 0.5)
    w1 = jax.random.uniform(kw1, (C, C, 3, 3), jnp.float32, -bound, bound)
    b1 = jax.random.uniform(kb1, (C,), jnp.float32, -bound, bound)
    w2 = jax.random.uniform(kw2, (C, C, 3, 3), jnp.float32, -bound, bound)
    b2 = jax.random.uniform(kb2, (C,), jnp.float32, -bound, bound)

    # Small samples: block the whole batch into one grid step (review item).
    out = residual_block(x, w1, b1, w2, b2, batch_block=2)
    out = jax.block_until_ready(out)

    ref = residual_block_ref(x, w1, b1, w2, b2)
    assert out.shape == (N, C, H, W)
    err = float(jnp.max(jnp.abs(out - ref)))
    assert jnp.allclose(out, ref, atol=1e-4, rtol=1e-4), err

    print("KERNEL_OK")
</pallas_src>

<mosaic_0001>
module attributes {stable_mosaic.version = 11 : i64} {
  func.func @residual_block_kernel(%arg0: i32, %arg1: memref<2x4x256xf32, #tpu.memory_space<vmem>>, %arg2: memref<2x256xi32, #tpu.memory_space<vmem>>, %arg3: memref<4x36xf32, #tpu.memory_space<vmem>>, %arg4: memref<4x36xf32, #tpu.memory_space<vmem>>, %arg5: memref<2x4x256xf32, #tpu.memory_space<vmem>>, %arg6: memref<36x256xf32, #tpu.memory_space<vmem>>) attributes {dimension_semantics = [#tpu.dimension_semantics<parallel>], iteration_bounds = array<i64: 1>, scalar_prefetch = 0 : i64, scratch_operands = 1 : i64, tpu.core_type = #tpu.core_type<tc>, window_params = [{transform_indices = @transform_0, window_bounds = array<i64: 2, 4, 256>}, {pipeline_mode = #tpu.pipeline_mode<synchronous>, transform_indices = @transform_1, window_bounds = array<i64: 2, 256>}, {pipeline_mode = #tpu.pipeline_mode<synchronous>, transform_indices = @transform_2, window_bounds = array<i64: 4, 36>}, {pipeline_mode = #tpu.pipeline_mode<synchronous>, transform_indices = @transform_3, window_bounds = array<i64: 4, 36>}, {transform_indices = @transform_4, window_bounds = array<i64: 2, 4, 256>}]} {
    %c0 = arith.constant 0 : index
    %c0_0 = arith.constant 0 : index
    %0 = vector.load %arg3[%c0, %c0_0] : memref<4x36xf32, #tpu.memory_space<vmem>>, vector<4x36xf32>
    %c0_1 = arith.constant 0 : index
    %c0_2 = arith.constant 0 : index
    %1 = vector.load %arg4[%c0_1, %c0_2] : memref<4x36xf32, #tpu.memory_space<vmem>>, vector<4x36xf32>
    %c0_3 = arith.constant 0 : index
    %c0_4 = arith.constant 0 : index
    %2 = vector.load %arg2[%c0_3, %c0_4] : memref<2x256xi32, #tpu.memory_space<vmem>>, vector<1x256xi32>
    %3 = vector.shape_cast %2 : vector<1x256xi32> to vector<1x256xi32>
    %4 = vector.broadcast %3 : vector<1x256xi32> to vector<4x256xi32>
    %c1 = arith.constant 1 : index
    %c0_5 = arith.constant 0 : index
    %5 = vector.load %arg2[%c1, %c0_5] : memref<2x256xi32, #tpu.memory_space<vmem>>, vector<1x256xi32>
    %6 = vector.shape_cast %5 : vector<1x256xi32> to vector<1x256xi32>
    %7 = vector.broadcast %6 : vector<1x256xi32> to vector<4x256xi32>
    %c0_i32 = arith.constant 0 : i32
    %8 = vector.broadcast %c0_i32 : i32 to vector<4x256xi32>
    %9 = arith.cmpi eq, %4, %8 : vector<4x256xi32>
    %c15_i32 = arith.constant 15 : i32
    %10 = vector.broadcast %c15_i32 : i32 to vector<4x256xi32>
    %11 = arith.cmpi eq, %4, %10 : vector<4x256xi32>
    %c0_i32_6 = arith.constant 0 : i32
    %12 = vector.broadcast %c0_i32_6 : i32 to vector<4x256xi32>
    %13 = arith.cmpi eq, %7, %12 : vector<4x256xi32>
    %c15_i32_7 = arith.constant 15 : i32
    %14 = vector.broadcast %c15_i32_7 : i32 to vector<4x256xi32>
    %15 = arith.cmpi eq, %7, %14 : vector<4x256xi32>
    %c0_8 = arith.constant 0 : index
    %c0_9 = arith.constant 0 : index
    %c0_10 = arith.constant 0 : index
    %16 = vector.load %arg1[%c0_8, %c0_9, %c0_10] : memref<2x4x256xf32, #tpu.memory_space<vmem>>, vector<1x4x256xf32>
    %17 = vector.shape_cast %16 : vector<1x4x256xf32> to vector<4x256xf32>
    %c1_i32 = arith.constant 1 : i32
    %18 = tpu.dynamic_rotate %17 by %c1_i32 dim 1 : vector<4x256xf32>, i32 -> vector<4x256xf32>
    %c255_i32 = arith.constant 255 : i32
    %19 = tpu.dynamic_rotate %17 by %c255_i32 dim 1 : vector<4x256xf32>, i32 -> vector<4x256xf32>
    %20 = arith.select %9, %19, %18 : vector<4x256xi1>, vector<4x256xf32>
    %21 = arith.select %11, %18, %19 : vector<4x256xi1>, vector<4x256xf32>
    %c16_i32 = arith.constant 16 : i32
    %22 = tpu.dynamic_rotate %20 by %c16_i32 dim 1 : vector<4x256xf32>, i32 -> vector<4x256xf32>
    %c240_i32 = arith.constant 240 : i32
    %23 = tpu.dynamic_rotate %20 by %c240_i32 dim 1 : vector<4x256xf32>, i32 -> vector<4x256xf32>
    %24 = arith.select %13, %23, %22 : vector<4x256xi1>, vector<4x256xf32>
    %25 = arith.select %15, %22, %23 : vector<4x256xi1>, vector<4x256xf32>
    %c0_11 = arith.constant 0 : index
    %c0_12 = arith.constant 0 : index
    %26 = vector.load %arg6[%c0_11, %c0_12] : memref<36x256xf32, #tpu.memory_space<vmem>>, vector<4x256xf32>
    tpu.vector_store %arg6[%c0_11, %c0_12], %24 {strides = array<i32>} : memref<36x256xf32, #tpu.memory_space<vmem>>, vector<4x256xf32>,
    %c12 = arith.constant 12 : index
    %c0_13 = arith.constant 0 : index
    %27 = vector.load %arg6[%c12, %c0_13] : memref<36x256xf32, #tpu.memory_space<vmem>>, vector<4x256xf32>
    tpu.vector_store %arg6[%c12, %c0_13], %20 {strides = array<i32>} : memref<36x256xf32, #tpu.memory_space<vmem>>, vector<4x256xf32>,
    %c24 = arith.constant 24 : index
    %c0_14 = arith.constant 0 : index
    %28 = vector.load %arg6[%c24, %c0_14] : memref<36x256xf32, #tpu.memory_space<vmem>>, vector<4x256xf32>
    tpu.vector_store %arg6[%c24, %c0_14], %25 {strides = array<i32>} : memref<36x256xf32, #tpu.memory_space<vmem>>, vector<4x256xf32>,
    %c16_i32_15 = arith.constant 16 : i32
    %29 = tpu.dynamic_rotate %17 by %c16_i32_15 dim 1 : vector<4x256xf32>, i32 -> vector<4x256xf32>
    %c240_i32_16 = arith.constant 240 : i32
    %30 = tpu.dynamic_rotate %17 by %c240_i32_16 dim 1 : vector<4x256xf32>, i32 -> vector<4x256xf32>
    %31 = arith.select %13, %30, %29 : vector<4x256xi1>, vector<4x256xf32>
    %32 = arith.select %15, %29, %30 : vector<4x256xi1>, vector<4x256xf32>
    %c4 = arith.constant 4 : index
    %c0_17 = arith.constant 0 : index
    %33 = vector.load %arg6[%c4, %c0_17] : memref<36x256xf32, #tpu.memory_space<vmem>>, vector<4x256xf32>
    tpu.vector_store %arg6[%c4, %c0_17], %31 {strides = array<i32>} : memref<36x256xf32, #tpu.memory_space<vmem>>, vector<4x256xf32>,
    %c16 = arith.constant 16 : index
    %c0_18 = arith.constant 0 : index
    %34 = vector.load %arg6[%c16, %c0_18] : memref<36x256xf32, #tpu.memory_space<vmem>>, vector<4x256xf32>
    tpu.vector_store %arg6[%c16, %c0_18], %17 {strides = array<i32>} : memref<36x256xf32, #tpu.memory_space<vmem>>, vector<4x256xf32>,
    %c28 = arith.constant 28 : index
    %c0_19 = arith.constant 0 : index
    %35 = vector.load %arg6[%c28, %c0_19] : memref<36x256xf32, #tpu.memory_space<vmem>>, vector<4x256xf32>
    tpu.vector_store %arg6[%c28, %c0_19], %32 {strides = array<i32>} : memref<36x256xf32, #tpu.memory_space<vmem>>, vector<4x256xf32>,
    %c16_i32_20 = arith.constant 16 : i32
    %36 = tpu.dynamic_rotate %21 by %c16_i32_20 dim 1 : vector<4x256xf32>, i32 -> vector<4x256xf32>
    %c240_i32_21 = arith.constant 240 : i32
    %37 = tpu.dynamic_rotate %21 by %c240_i32_21 dim 1 : vector<4x256xf32>, i32 -> vector<4x256xf32>
    %38 = arith.select %13, %37, %36 : vector<4x256xi1>, vector<4x256xf32>
    %39 = arith.select %15, %36, %37 : vector<4x256xi1>, vector<4x256xf32>
    %c8 = arith.constant 8 : index
    %c0_22 = arith.constant 0 : index
    %40 = vector.load %arg6[%c8, %c0_22] : memref<36x256xf32, #tpu.memory_space<vmem>>, vector<4x256xf32>
    tpu.vector_store %arg6[%c8, %c0_22], %38 {strides = array<i32>} : memref<36x256xf32, #tpu.memory_space<vmem>>, vector<4x256xf32>,
    %c20 = arith.constant 20 : index
    %c0_23 = arith.constant 0 : index
    %41 = vector.load %arg6[%c20, %c0_23] : memref<36x256xf32, #tpu.memory_space<vmem>>, vector<4x256xf32>
    tpu.vector_store %arg6[%c20, %c0_23], %21 {strides = array<i32>} : memref<36x256xf32, #tpu.memory_space<vmem>>, vector<4x256xf32>,
    %c32 = arith.constant 32 : index
    %c0_24 = arith.constant 0 : index
    %42 = vector.load %arg6[%c32, %c0_24] : memref<36x256xf32, #tpu.memory_space<vmem>>, vector<4x256xf32>
    tpu.vector_store %arg6[%c32, %c0_24], %39 {strides = array<i32>} : memref<36x256xf32, #tpu.memory_space<vmem>>, vector<4x256xf32>,
    %c0_25 = arith.constant 0 : index
    %c0_26 = arith.constant 0 : index
    %43 = vector.load %arg6[%c0_25, %c0_26] : memref<36x256xf32, #tpu.memory_space<vmem>>, vector<36x256xf32>
    %cst = arith.constant dense<0.000000e+00> : vector<4x256xf32>
    %44 = tpu.matmul %0, %43, %cst {dimension_numbers = #tpu.dot_dimension_numbers<[1], [0], [0], [1], [0, 0, 1, 1], [], []>} : vector<4x36xf32>, vector<36x256xf32>, vector<4x256xf32> -> vector<4x256xf32>
    %cst_27 = arith.constant dense<0.000000e+00> : vector<4xf32>
    %45 = vector.multi_reduction <add>, %44, %cst_27 [1] : vector<4x256xf32> to vector<4xf32>
    %46 = vector.shape_cast %45 : vector<4xf32> to vector<4x1xf32>
    %cst_28 = arith.constant 3.906250e-03 : f32
    %47 = vector.broadcast %cst_28 : f32 to vector<4x1xf32>
    %48 = arith.mulf %46, %47 : vector<4x1xf32>
    %49 = vector.broadcast %48 : vector<4x1xf32> to vector<4x256xf32>
    %50 = arith.subf %44, %49 : vector<4x256xf32>
    %51 = arith.mulf %50, %50 : vector<4x256xf32>
    %cst_29 = arith.constant dense<0.000000e+00> : vector<4xf32>
    %52 = vector.multi_reduction <add>, %51, %cst_29 [1] : vector<4x256xf32> to vector<4xf32>
    %53 = vector.shape_cast %52 : vector<4xf32> to vector<4x1xf32>
    %cst_30 = arith.constant 3.906250e-03 : f32
    %54 = vector.broadcast %cst_30 : f32 to vector<4x1xf32>
    %55 = arith.mulf %53, %54 : vector<4x1xf32>
    %cst_31 = arith.constant 9.99999974E-6 : f32
    %56 = vector.broadcast %cst_31 : f32 to vector<4x1xf32>
    %57 = arith.addf %55, %56 : vector<4x1xf32>
    %58 = math.rsqrt %57 : vector<4x1xf32>
    %59 = vector.broadcast %58 : vector<4x1xf32> to vector<4x256xf32>
    %60 = arith.mulf %50, %59 : vector<4x256xf32>
    %cst_32 = arith.constant 0.000000e+00 : f32
    %61 = vector.broadcast %cst_32 : f32 to vector<4x256xf32>
    %62 = arith.maximumf %60, %61 : vector<4x256xf32>
    %c1_i32_33 = arith.constant 1 : i32
    %63 = tpu.dynamic_rotate %62 by %c1_i32_33 dim 1 : vector<4x256xf32>, i32 -> vector<4x256xf32>
    %c255_i32_34 = arith.constant 255 : i32
    %64 = tpu.dynamic_rotate %62 by %c255_i32_34 dim 1 : vector<4x256xf32>, i32 -> vector<4x256xf32>
    %65 = arith.select %9, %64, %63 : vector<4x256xi1>, vector<4x256xf32>
    %66 = arith.select %11, %63, %64 : vector<4x256xi1>, vector<4x256xf32>
    %c16_i32_35 = arith.constant 16 : i32
    %67 = tpu.dynamic_rotate %65 by %c16_i32_35 dim 1 : vector<4x256xf32>, i32 -> vector<4x256xf32>
    %c240_i32_36 = arith.constant 240 : i32
    %68 = tpu.dynamic_rotate %65 by %c240_i32_36 dim 1 : vector<4x256xf32>, i32 -> vector<4x256xf32>
    %69 = arith.select %13, %68, %67 : vector<4x256xi1>, vector<4x256xf32>
    %70 = arith.select %15, %67, %68 : vector<4x256xi1>, vector<4x256xf32>
    %c0_37 = arith.constant 0 : index
    %c0_38 = arith.constant 0 : index
    %71 = vector.load %arg6[%c0_37, %c0_38] : memref<36x256xf32, #tpu.memory_space<vmem>>, vector<4x256xf32>
    tpu.vector_store %arg6[%c0_37, %c0_38], %69 {strides = array<i32>} : memref<36x256xf32, #tpu.memory_space<vmem>>, vector<4x256xf32>,
    %c12_39 = arith.constant 12 : index
    %c0_40 = arith.constant 0 : index
    %72 = vector.load %arg6[%c12_39, %c0_40] : memref<36x256xf32, #tpu.memory_space<vmem>>, vector<4x256xf32>
    tpu.vector_store %arg6[%c12_39, %c0_40], %65 {strides = array<i32>} : memref<36x256xf32, #tpu.memory_space<vmem>>, vector<4x256xf32>,
    %c24_41 = arith.constant 24 : index
    %c0_42 = arith.constant 0 : index
    %73 = vector.load %arg6[%c24_41, %c0_42] : memref<36x256xf32, #tpu.memory_space<vmem>>, vector<4x256xf32>
    tpu.vector_store %arg6[%c24_41, %c0_42], %70 {strides = array<i32>} : memref<36x256xf32, #tpu.memory_space<vmem>>, vector<4x256xf32>,
    %c16_i32_43 = arith.constant 16 : i32
    %74 = tpu.dynamic_rotate %62 by %c16_i32_43 dim 1 : vector<4x256xf32>, i32 -> vector<4x256xf32>
    %c240_i32_44 = arith.constant 240 : i32
    %75 = tpu.dynamic_rotate %62 by %c240_i32_44 dim 1 : vector<4x256xf32>, i32 -> vector<4x256xf32>
    %76 = arith.select %13, %75, %74 : vector<4x256xi1>, vector<4x256xf32>
    %77 = arith.select %15, %74, %75 : vector<4x256xi1>, vector<4x256xf32>
    %c4_45 = arith.constant 4 : index
    %c0_46 = arith.constant 0 : index
    %78 = vector.load %arg6[%c4_45, %c0_46] : memref<36x256xf32, #tpu.memory_space<vmem>>, vector<4x256xf32>
    tpu.vector_store %arg6[%c4_45, %c0_46], %76 {strides = array<i32>} : memref<36x256xf32, #tpu.memory_space<vmem>>, vector<4x256xf32>,
    %c16_47 = arith.constant 16 : index
    %c0_48 = arith.constant 0 : index
    %79 = vector.load %arg6[%c16_47, %c0_48] : memref<36x256xf32, #tpu.memory_space<vmem>>, vector<4x256xf32>
    tpu.vector_store %arg6[%c16_47, %c0_48], %62 {strides = array<i32>} : memref<36x256xf32, #tpu.memory_space<vmem>>, vector<4x256xf32>,
    %c28_49 = arith.constant 28 : index
    %c0_50 = arith.constant 0 : index
    %80 = vector.load %arg6[%c28_49, %c0_50] : memref<36x256xf32, #tpu.memory_space<vmem>>, vector<4x256xf32>
    tpu.vector_store %arg6[%c28_49, %c0_50], %77 {strides = array<i32>} : memref<36x256xf32, #tpu.memory_space<vmem>>, vector<4x256xf32>,
    %c16_i32_51 = arith.constant 16 : i32
    %81 = tpu.dynamic_rotate %66 by %c16_i32_51 dim 1 : vector<4x256xf32>, i32 -> vector<4x256xf32>
    %c240_i32_52 = arith.constant 240 : i32
    %82 = tpu.dynamic_rotate %66 by %c240_i32_52 dim 1 : vector<4x256xf32>, i32 -> vector<4x256xf32>
    %83 = arith.select %13, %82, %81 : vector<4x256xi1>, vector<4x256xf32>
    %84 = arith.select %15, %81, %82 : vector<4x256xi1>, vector<4x256xf32>
    %c8_53 = arith.constant 8 : index
    %c0_54 = arith.constant 0 : index
    %85 = vector.load %arg6[%c8_53, %c0_54] : memref<36x256xf32, #tpu.memory_space<vmem>>, vector<4x256xf32>
    tpu.vector_store %arg6[%c8_53, %c0_54], %83 {strides = array<i32>} : memref<36x256xf32, #tpu.memory_space<vmem>>, vector<4x256xf32>,
    %c20_55 = arith.constant 20 : index
    %c0_56 = arith.constant 0 : index
    %86 = vector.load %arg6[%c20_55, %c0_56] : memref<36x256xf32, #tpu.memory_space<vmem>>, vector<4x256xf32>
    tpu.vector_store %arg6[%c20_55, %c0_56], %66 {strides = array<i32>} : memref<36x256xf32, #tpu.memory_space<vmem>>, vector<4x256xf32>,
    %c32_57 = arith.constant 32 : index
    %c0_58 = arith.constant 0 : index
    %87 = vector.load %arg6[%c32_57, %c0_58] : memref<36x256xf32, #tpu.memory_space<vmem>>, vector<4x256xf32>
    tpu.vector_store %arg6[%c32_57, %c0_58], %84 {strides = array<i32>} : memref<36x256xf32, #tpu.memory_space<vmem>>, vector<4x256xf32>,
    %c0_59 = arith.constant 0 : index
    %c0_60 = arith.constant 0 : index
    %88 = vector.load %arg6[%c0_59, %c0_60] : memref<36x256xf32, #tpu.memory_space<vmem>>, vector<36x256xf32>
    %cst_61 = arith.constant dense<0.000000e+00> : vector<4x256xf32>
    %89 = tpu.matmul %1, %88, %cst_61 {dimension_numbers = #tpu.dot_dimension_numbers<[1], [0], [0], [1], [0, 0, 1, 1], [], []>} : vector<4x36xf32>, vector<36x256xf32>, vector<4x256xf32> -> vector<4x256xf32>
    %cst_62 = arith.constant dense<0.000000e+00> : vector<4xf32>
    %90 = vector.multi_reduction <add>, %89, %cst_62 [1] : vector<4x256xf32> to vector<4xf32>
    %91 = vector.shape_cast %90 : vector<4xf32> to vector<4x1xf32>
    %cst_63 = arith.constant 3.906250e-03 : f32
    %92 = vector.broadcast %cst_63 : f32 to vector<4x1xf32>
    %93 = arith.mulf %91, %92 : vector<4x1xf32>
    %94 = vector.broadcast %93 : vector<4x1xf32> to vector<4x256xf32>
    %95 = arith.subf %89, %94 : vector<4x256xf32>
    %96 = arith.mulf %95, %95 : vector<4x256xf32>
    %cst_64 = arith.constant dense<0.000000e+00> : vector<4xf32>
    %97 = vector.multi_reduction <add>, %96, %cst_64 [1] : vector<4x256xf32> to vector<4xf32>
    %98 = vector.shape_cast %97 : vector<4xf32> to vector<4x1xf32>
    %cst_65 = arith.constant 3.906250e-03 : f32
    %99 = vector.broadcast %cst_65 : f32 to vector<4x1xf32>
    %100 = arith.mulf %98, %99 : vector<4x1xf32>
    %cst_66 = arith.constant 9.99999974E-6 : f32
    %101 = vector.broadcast %cst_66 : f32 to vector<4x1xf32>
    %102 = arith.addf %100, %101 : vector<4x1xf32>
    %103 = math.rsqrt %102 : vector<4x1xf32>
    %104 = vector.broadcast %103 : vector<4x1xf32> to vector<4x256xf32>
    %105 = arith.mulf %95, %104 : vector<4x256xf32>
    %106 = arith.addf %17, %105 : vector<4x256xf32>
    %c0_67 = arith.constant 0 : index
    %c0_68 = arith.constant 0 : index
    %c0_69 = arith.constant 0 : index
    %107 = vector.load %arg5[%c0_67, %c0_68, %c0_69] : memref<2x4x256xf32, #tpu.memory_space<vmem>>, vector<1x4x256xf32>
    %108 = vector.shape_cast %107 : vector<1x4x256xf32> to vector<4x256xf32>
    %109 = vector.shape_cast %106 : vector<4x256xf32> to vector<1x4x256xf32>
    tpu.vector_store %arg5[%c0_67, %c0_68, %c0_69], %109 {strides = array<i32>} : memref<2x4x256xf32, #tpu.memory_space<vmem>>, vector<1x4x256xf32>,
    %c1_70 = arith.constant 1 : index
    %c0_71 = arith.constant 0 : index
    %c0_72 = arith.constant 0 : index
    %110 = vector.load %arg1[%c1_70, %c0_71, %c0_72] : memref<2x4x256xf32, #tpu.memory_space<vmem>>, vector<1x4x256xf32>
    %111 = vector.shape_cast %110 : vector<1x4x256xf32> to vector<4x256xf32>
    %c1_i32_73 = arith.constant 1 : i32
    %112 = tpu.dynamic_rotate %111 by %c1_i32_73 dim 1 : vector<4x256xf32>, i32 -> vector<4x256xf32>
    %c255_i32_74 = arith.constant 255 : i32
    %113 = tpu.dynamic_rotate %111 by %c255_i32_74 dim 1 : vector<4x256xf32>, i32 -> vector<4x256xf32>
    %114 = arith.select %9, %113, %112 : vector<4x256xi1>, vector<4x256xf32>
    %115 = arith.select %11, %112, %113 : vector<4x256xi1>, vector<4x256xf32>
    %c16_i32_75 = arith.constant 16 : i32
    %116 = tpu.dynamic_rotate %114 by %c16_i32_75 dim 1 : vector<4x256xf32>, i32 -> vector<4x256xf32>
    %c240_i32_76 = arith.constant 240 : i32
    %117 = tpu.dynamic_rotate %114 by %c240_i32_76 dim 1 : vector<4x256xf32>, i32 -> vector<4x256xf32>
    %118 = arith.select %13, %117, %116 : vector<4x256xi1>, vector<4x256xf32>
    %119 = arith.select %15, %116, %117 : vector<4x256xi1>, vector<4x256xf32>
    %c0_77 = arith.constant 0 : index
    %c0_78 = arith.constant 0 : index
    %120 = vector.load %arg6[%c0_77, %c0_78] : memref<36x256xf32, #tpu.memory_space<vmem>>, vector<4x256xf32>
    tpu.vector_store %arg6[%c0_77, %c0_78], %118 {strides = array<i32>} : memref<36x256xf32, #tpu.memory_space<vmem>>, vector<4x256xf32>,
    %c12_79 = arith.constant 12 : index
    %c0_80 = arith.constant 0 : index
    %121 = vector.load %arg6[%c12_79, %c0_80] : memref<36x256xf32, #tpu.memory_space<vmem>>, vector<4x256xf32>
    tpu.vector_store %arg6[%c12_79, %c0_80], %114 {strides = array<i32>} : memref<36x256xf32, #tpu.memory_space<vmem>>, vector<4x256xf32>,
    %c24_81 = arith.constant 24 : index
    %c0_82 = arith.constant 0 : index
    %122 = vector.load %arg6[%c24_81, %c0_82] : memref<36x256xf32, #tpu.memory_space<vmem>>, vector<4x256xf32>
    tpu.vector_store %arg6[%c24_81, %c0_82], %119 {strides = array<i32>} : memref<36x256xf32, #tpu.memory_space<vmem>>, vector<4x256xf32>,
    %c16_i32_83 = arith.constant 16 : i32
    %123 = tpu.dynamic_rotate %111 by %c16_i32_83 dim 1 : vector<4x256xf32>, i32 -> vector<4x256xf32>
    %c240_i32_84 = arith.constant 240 : i32
    %124 = tpu.dynamic_rotate %111 by %c240_i32_84 dim 1 : vector<4x256xf32>, i32 -> vector<4x256xf32>
    %125 = arith.select %13, %124, %123 : vector<4x256xi1>, vector<4x256xf32>
    %126 = arith.select %15, %123, %124 : vector<4x256xi1>, vector<4x256xf32>
    %c4_85 = arith.constant 4 : index
    %c0_86 = arith.constant 0 : index
    %127 = vector.load %arg6[%c4_85, %c0_86] : memref<36x256xf32, #tpu.memory_space<vmem>>, vector<4x256xf32>
    tpu.vector_store %arg6[%c4_85, %c0_86], %125 {strides = array<i32>} : memref<36x256xf32, #tpu.memory_space<vmem>>, vector<4x256xf32>,
    %c16_87 = arith.constant 16 : index
    %c0_88 = arith.constant 0 : index
    %128 = vector.load %arg6[%c16_87, %c0_88] : memref<36x256xf32, #tpu.memory_space<vmem>>, vector<4x256xf32>
    tpu.vector_store %arg6[%c16_87, %c0_88], %111 {strides = array<i32>} : memref<36x256xf32, #tpu.memory_space<vmem>>, vector<4x256xf32>,
    %c28_89 = arith.constant 28 : index
    %c0_90 = arith.constant 0 : index
    %129 = vector.load %arg6[%c28_89, %c0_90] : memref<36x256xf32, #tpu.memory_space<vmem>>, vector<4x256xf32>
    tpu.vector_store %arg6[%c28_89, %c0_90], %126 {strides = array<i32>} : memref<36x256xf32, #tpu.memory_space<vmem>>, vector<4x256xf32>,
    %c16_i32_91 = arith.constant 16 : i32
    %130 = tpu.dynamic_rotate %115 by %c16_i32_91 dim 1 : vector<4x256xf32>, i32 -> vector<4x256xf32>
    %c240_i32_92 = arith.constant 240 : i32
    %131 = tpu.dynamic_rotate %115 by %c240_i32_92 dim 1 : vector<4x256xf32>, i32 -> vector<4x256xf32>
    %132 = arith.select %13, %131, %130 : vector<4x256xi1>, vector<4x256xf32>
    %133 = arith.select %15, %130, %131 : vector<4x256xi1>, vector<4x256xf32>
    %c8_93 = arith.constant 8 : index
    %c0_94 = arith.constant 0 : index
    %134 = vector.load %arg6[%c8_93, %c0_94] : memref<36x256xf32, #tpu.memory_space<vmem>>, vector<4x256xf32>
    tpu.vector_store %arg6[%c8_93, %c0_94], %132 {strides = array<i32>} : memref<36x256xf32, #tpu.memory_space<vmem>>, vector<4x256xf32>,
    %c20_95 = arith.constant 20 : index
    %c0_96 = arith.constant 0 : index
    %135 = vector.load %arg6[%c20_95, %c0_96] : memref<36x256xf32, #tpu.memory_space<vmem>>, vector<4x256xf32>
    tpu.vector_store %arg6[%c20_95, %c0_96], %115 {strides = array<i32>} : memref<36x256xf32, #tpu.memory_space<vmem>>, vector<4x256xf32>,
    %c32_97 = arith.constant 32 : index
    %c0_98 = arith.constant 0 : index
    %136 = vector.load %arg6[%c32_97, %c0_98] : memref<36x256xf32, #tpu.memory_space<vmem>>, vector<4x256xf32>
    tpu.vector_store %arg6[%c32_97, %c0_98], %133 {strides = array<i32>} : memref<36x256xf32, #tpu.memory_space<vmem>>, vector<4x256xf32>,
    %c0_99 = arith.constant 0 : index
    %c0_100 = arith.constant 0 : index
    %137 = vector.load %arg6[%c0_99, %c0_100] : memref<36x256xf32, #tpu.memory_space<vmem>>, vector<36x256xf32>
    %cst_101 = arith.constant dense<0.000000e+00> : vector<4x256xf32>
    %138 = tpu.matmul %0, %137, %cst_101 {dimension_numbers = #tpu.dot_dimension_numbers<[1], [0], [0], [1], [0, 0, 1, 1], [], []>} : vector<4x36xf32>, vector<36x256xf32>, vector<4x256xf32> -> vector<4x256xf32>
    %cst_102 = arith.constant dense<0.000000e+00> : vector<4xf32>
    %139 = vector.multi_reduction <add>, %138, %cst_102 [1] : vector<4x256xf32> to vector<4xf32>
    %140 = vector.shape_cast %139 : vector<4xf32> to vector<4x1xf32>
    %cst_103 = arith.constant 3.906250e-03 : f32
    %141 = vector.broadcast %cst_103 : f32 to vector<4x1xf32>
    %142 = arith.mulf %140, %141 : vector<4x1xf32>
    %143 = vector.broadcast %142 : vector<4x1xf32> to vector<4x256xf32>
    %144 = arith.subf %138, %143 : vector<4x256xf32>
    %145 = arith.mulf %144, %144 : vector<4x256xf32>
    %cst_104 = arith.constant dense<0.000000e+00> : vector<4xf32>
    %146 = vector.multi_reduction <add>, %145, %cst_104 [1] : vector<4x256xf32> to vector<4xf32>
    %147 = vector.shape_cast %146 : vector<4xf32> to vector<4x1xf32>
    %cst_105 = arith.constant 3.906250e-03 : f32
    %148 = vector.broadcast %cst_105 : f32 to vector<4x1xf32>
    %149 = arith.mulf %147, %148 : vector<4x1xf32>
    %cst_106 = arith.constant 9.99999974E-6 : f32
    %150 = vector.broadcast %cst_106 : f32 to vector<4x1xf32>
    %151 = arith.addf %149, %150 : vector<4x1xf32>
    %152 = math.rsqrt %151 : vector<4x1xf32>
    %153 = vector.broadcast %152 : vector<4x1xf32> to vector<4x256xf32>
    %154 = arith.mulf %144, %153 : vector<4x256xf32>
    %cst_107 = arith.constant 0.000000e+00 : f32
    %155 = vector.broadcast %cst_107 : f32 to vector<4x256xf32>
    %156 = arith.maximumf %154, %155 : vector<4x256xf32>
    %c1_i32_108 = arith.constant 1 : i32
    %157 = tpu.dynamic_rotate %156 by %c1_i32_108 dim 1 : vector<4x256xf32>, i32 -> vector<4x256xf32>
    %c255_i32_109 = arith.constant 255 : i32
    %158 = tpu.dynamic_rotate %156 by %c255_i32_109 dim 1 : vector<4x256xf32>, i32 -> vector<4x256xf32>
    %159 = arith.select %9, %158, %157 : vector<4x256xi1>, vector<4x256xf32>
    %160 = arith.select %11, %157, %158 : vector<4x256xi1>, vector<4x256xf32>
    %c16_i32_110 = arith.constant 16 : i32
    %161 = tpu.dynamic_rotate %159 by %c16_i32_110 dim 1 : vector<4x256xf32>, i32 -> vector<4x256xf32>
    %c240_i32_111 = arith.constant 240 : i32
    %162 = tpu.dynamic_rotate %159 by %c240_i32_111 dim 1 : vector<4x256xf32>, i32 -> vector<4x256xf32>
    %163 = arith.select %13, %162, %161 : vector<4x256xi1>, vector<4x256xf32>
    %164 = arith.select %15, %161, %162 : vector<4x256xi1>, vector<4x256xf32>
    %c0_112 = arith.constant 0 : index
    %c0_113 = arith.constant 0 : index
    %165 = vector.load %arg6[%c0_112, %c0_113] : memref<36x256xf32, #tpu.memory_space<vmem>>, vector<4x256xf32>
    tpu.vector_store %arg6[%c0_112, %c0_113], %163 {strides = array<i32>} : memref<36x256xf32, #tpu.memory_space<vmem>>, vector<4x256xf32>,
    %c12_114 = arith.constant 12 : index
    %c0_115 = arith.constant 0 : index
    %166 = vector.load %arg6[%c12_114, %c0_115] : memref<36x256xf32, #tpu.memory_space<vmem>>, vector<4x256xf32>
    tpu.vector_store %arg6[%c12_114, %c0_115], %159 {strides = array<i32>} : memref<36x256xf32, #tpu.memory_space<vmem>>, vector<4x256xf32>,
    %c24_116 = arith.constant 24 : index
    %c0_117 = arith.constant 0 : index
    %167 = vector.load %arg6[%c24_116, %c0_117] : memref<36x256xf32, #tpu.memory_space<vmem>>, vector<4x256xf32>
    tpu.vector_store %arg6[%c24_116, %c0_117], %164 {strides = array<i32>} : memref<36x256xf32, #tpu.memory_space<vmem>>, vector<4x256xf32>,
    %c16_i32_118 = arith.constant 16 : i32
    %168 = tpu.dynamic_rotate %156 by %c16_i32_118 dim 1 : vector<4x256xf32>, i32 -> vector<4x256xf32>
    %c240_i32_119 = arith.constant 240 : i32
    %169 = tpu.dynamic_rotate %156 by %c240_i32_119 dim 1 : vector<4x256xf32>, i32 -> vector<4x256xf32>
    %170 = arith.select %13, %169, %168 : vector<4x256xi1>, vector<4x256xf32>
    %171 = arith.select %15, %168, %169 : vector<4x256xi1>, vector<4x256xf32>
    %c4_120 = arith.constant 4 : index
    %c0_121 = arith.constant 0 : index
    %172 = vector.load %arg6[%c4_120, %c0_121] : memref<36x256xf32, #tpu.memory_space<vmem>>, vector<4x256xf32>
    tpu.vector_store %arg6[%c4_120, %c0_121], %170 {strides = array<i32>} : memref<36x256xf32, #tpu.memory_space<vmem>>, vector<4x256xf32>,
    %c16_122 = arith.constant 16 : index
    %c0_123 = arith.constant 0 : index
    %173 = vector.load %arg6[%c16_122, %c0_123] : memref<36x256xf32, #tpu.memory_space<vmem>>, vector<4x256xf32>
    tpu.vector_store %arg6[%c16_122, %c0_123], %156 {strides = array<i32>} : memref<36x256xf32, #tpu.memory_space<vmem>>, vector<4x256xf32>,
    %c28_124 = arith.constant 28 : index
    %c0_125 = arith.constant 0 : index
    %174 = vector.load %arg6[%c28_124, %c0_125] : memref<36x256xf32, #tpu.memory_space<vmem>>, vector<4x256xf32>
    tpu.vector_store %arg6[%c28_124, %c0_125], %171 {strides = array<i32>} : memref<36x256xf32, #tpu.memory_space<vmem>>, vector<4x256xf32>,
    %c16_i32_126 = arith.constant 16 : i32
    %175 = tpu.dynamic_rotate %160 by %c16_i32_126 dim 1 : vector<4x256xf32>, i32 -> vector<4x256xf32>
    %c240_i32_127 = arith.constant 240 : i32
    %176 = tpu.dynamic_rotate %160 by %c240_i32_127 dim 1 : vector<4x256xf32>, i32 -> vector<4x256xf32>
    %177 = arith.select %13, %176, %175 : vector<4x256xi1>, vector<4x256xf32>
    %178 = arith.select %15, %175, %176 : vector<4x256xi1>, vector<4x256xf32>
    %c8_128 = arith.constant 8 : index
    %c0_129 = arith.constant 0 : index
    %179 = vector.load %arg6[%c8_128, %c0_129] : memref<36x256xf32, #tpu.memory_space<vmem>>, vector<4x256xf32>
    tpu.vector_store %arg6[%c8_128, %c0_129], %177 {strides = array<i32>} : memref<36x256xf32, #tpu.memory_space<vmem>>, vector<4x256xf32>,
    %c20_130 = arith.constant 20 : index
    %c0_131 = arith.constant 0 : index
    %180 = vector.load %arg6[%c20_130, %c0_131] : memref<36x256xf32, #tpu.memory_space<vmem>>, vector<4x256xf32>
    tpu.vector_store %arg6[%c20_130, %c0_131], %160 {strides = array<i32>} : memref<36x256xf32, #tpu.memory_space<vmem>>, vector<4x256xf32>,
    %c32_132 = arith.constant 32 : index
    %c0_133 = arith.constant 0 : index
    %181 = vector.load %arg6[%c32_132, %c0_133] : memref<36x256xf32, #tpu.memory_space<vmem>>, vector<4x256xf32>
    tpu.vector_store %arg6[%c32_132, %c0_133], %178 {strides = array<i32>} : memref<36x256xf32, #tpu.memory_space<vmem>>, vector<4x256xf32>,
    %c0_134 = arith.constant 0 : index
    %c0_135 = arith.constant 0 : index
    %182 = vector.load %arg6[%c0_134, %c0_135] : memref<36x256xf32, #tpu.memory_space<vmem>>, vector<36x256xf32>
    %cst_136 = arith.constant dense<0.000000e+00> : vector<4x256xf32>
    %183 = tpu.matmul %1, %182, %cst_136 {dimension_numbers = #tpu.dot_dimension_numbers<[1], [0], [0], [1], [0, 0, 1, 1], [], []>} : vector<4x36xf32>, vector<36x256xf32>, vector<4x256xf32> -> vector<4x256xf32>
    %cst_137 = arith.constant dense<0.000000e+00> : vector<4xf32>
    %184 = vector.multi_reduction <add>, %183, %cst_137 [1] : vector<4x256xf32> to vector<4xf32>
    %185 = vector.shape_cast %184 : vector<4xf32> to vector<4x1xf32>
    %cst_138 = arith.constant 3.906250e-03 : f32
    %186 = vector.broadcast %cst_138 : f32 to vector<4x1xf32>
    %187 = arith.mulf %185, %186 : vector<4x1xf32>
    %188 = vector.broadcast %187 : vector<4x1xf32> to vector<4x256xf32>
    %189 = arith.subf %183, %188 : vector<4x256xf32>
    %190 = arith.mulf %189, %189 : vector<4x256xf32>
    %cst_139 = arith.constant dense<0.000000e+00> : vector<4xf32>
    %191 = vector.multi_reduction <add>, %190, %cst_139 [1] : vector<4x256xf32> to vector<4xf32>
    %192 = vector.shape_cast %191 : vector<4xf32> to vector<4x1xf32>
    %cst_140 = arith.constant 3.906250e-03 : f32
    %193 = vector.broadcast %cst_140 : f32 to vector<4x1xf32>
    %194 = arith.mulf %192, %193 : vector<4x1xf32>
    %cst_141 = arith.constant 9.99999974E-6 : f32
    %195 = vector.broadcast %cst_141 : f32 to vector<4x1xf32>
    %196 = arith.addf %194, %195 : vector<4x1xf32>
    %197 = math.rsqrt %196 : vector<4x1xf32>
    %198 = vector.broadcast %197 : vector<4x1xf32> to vector<4x256xf32>
    %199 = arith.mulf %189, %198 : vector<4x256xf32>
    %200 = arith.addf %111, %199 : vector<4x256xf32>
    %c1_142 = arith.constant 1 : index
    %c0_143 = arith.constant 0 : index
    %c0_144 = arith.constant 0 : index
    %201 = vector.load %arg5[%c1_142, %c0_143, %c0_144] : memref<2x4x256xf32, #tpu.memory_space<vmem>>, vector<1x4x256xf32>
    %202 = vector.shape_cast %201 : vector<1x4x256xf32> to vector<4x256xf32>
    %203 = vector.shape_cast %200 : vector<4x256xf32> to vector<1x4x256xf32>
    tpu.vector_store %arg5[%c1_142, %c0_143, %c0_144], %203 {strides = array<i32>} : memref<2x4x256xf32, #tpu.memory_space<vmem>>, vector<1x4x256xf32>,
    return
  }
  func.func @transform_0(%arg0: i32) -> (i32, i32, i32) {
    %c0_i32 = arith.constant 0 : i32
    %c0_i32_0 = arith.constant 0 : i32
    %c0_i32_1 = arith.constant 0 : i32
    return %arg0, %c0_i32, %c0_i32_0 : i32, i32, i32
  }
  func.func @transform_1(%arg0: i32) -> (i32, i32) {
    %c0_i32 = arith.constant 0 : i32
    %c0_i32_0 = arith.constant 0 : i32
    %c0_i32_1 = arith.constant 0 : i32
    return %c0_i32, %c0_i32_0 : i32, i32
  }
  func.func @transform_2(%arg0: i32) -> (i32, i32) {
    %c0_i32 = arith.constant 0 : i32
    %c0_i32_0 = arith.constant 0 : i32
    %c0_i32_1 = arith.constant 0 : i32
    return %c0_i32, %c0_i32_0 : i32, i32
  }
  func.func @transform_3(%arg0: i32) -> (i32, i32) {
    %c0_i32 = arith.constant 0 : i32
    %c0_i32_0 = arith.constant 0 : i32
    %c0_i32_1 = arith.constant 0 : i32
    return %c0_i32, %c0_i32_0 : i32, i32
  }
  func.func @transform_4(%arg0: i32) -> (i32, i32, i32) {
    %c0_i32 = arith.constant 0 : i32
    %c0_i32_0 = arith.constant 0 : i32
    %c0_i32_1 = arith.constant 0 : i32
    return %arg0, %c0_i32, %c0_i32_0 : i32, i32, i32
  }
}

</mosaic_0001>

<llo_original>
// kernel: tpu_custom_call.1
$region0: #{tpu_custom_call.1}
  #allocation0 [shape = 'u32[]', space=smem, size = 0x4, offset = 0x4, fixed_abs, tag = 'smem constant byte address 0x4 - core index']
  #allocation1 [shape = 'u32[144,128]{1,0:T(1,128)}', space=vmem, size = 0x12000, scoped, tag = 'internal scratch']
  #allocation2 [shape = 'f32[36,256]{1,0:T(8,128)}', space=vmem, size = 0xa000, scoped, tag = 'scratch operand']
  %s0 = inlined_call_operand.hbm [shape: f32[2,4,256], index: 0, kind: input, shape index: {}]
  %s1 = inlined_call_operand.hbm [shape: s32[2,256], index: 1, kind: input, shape index: {}]
  %s2 = inlined_call_operand.hbm [shape: f32[4,36], index: 2, kind: input, shape index: {}]
  %s3 = inlined_call_operand.vmem [shape: f32[4,36], index: 3, kind: input, shape index: {}]
  %s4 = inlined_call_operand.hbm [shape: f32[2,4,256], index: 4, kind: output, shape index: {}]
  %s5 = sld [smem:[#allocation0]]
  $region38: #{tpu_custom_call.1} parent=0
    _
  %s7 = ssub.s32 1, %s5
  %s8 = scalar_select 0, %s7, %s5
  $region1: #{tpu_custom_call.1} parent=0
    #allocation3 [shape = 'u8[8192]{0}', space=vmem, size = 0x2000, scoped, tag = 'input window, operand 0, single buffered']
    #allocation4 [shape = 's32[1]{0}', space=sflag, size = 0x4, scoped, tag = 'scoped memory for tpu_custom_call.1']
    #allocation5 [shape = 's32[1]{0}', space=sflag, size = 0x4, scoped, tag = 'scoped memory for tpu_custom_call.1']
    #allocation6 [shape = 'u8[2048]{0}', space=vmem, size = 0x800, scoped, tag = 'input window, operand 1, single buffered']
    #allocation7 [shape = 's32[1]{0}', space=sflag, size = 0x4, scoped, tag = 'scoped memory for tpu_custom_call.1']
    #allocation8 [shape = 'u8[2048]{0}', space=vmem, size = 0x800, scoped, tag = 'input window, operand 2, single buffered']
    #allocation9 [shape = 'u8[8192]{0}', space=vmem, size = 0x2000, scoped, tag = 'output window, operand 0, single buffered']
    %9 = vsyncpa [#allocation4], 0
    %10 = vsyncpa [#allocation7], 0
    %11 = vsyncpa [#allocation5], 0
    // Predicated region
    $region2: #{tpu_custom_call.1} parent=1 // pred_check
      _
    $region3: #{tpu_custom_call.1} parent=1 // pred_check_branch
      %13 = sbr.rel (0) target = $region5
    $region4: #{tpu_custom_call.1} parent=1 // pred_region
      %s15 = ssub.s32 256, 256
      %16 = vsyncadd [#allocation4], %s15
      %s17 = sshll.u32 [#allocation3], 4
      %s18 = int_to_ptr.vmem [resolvable:$true] %s17
      %23 = dma.hbm_to_vmem [thread:$0]  %s0, 256, %s18, [#allocation4], 128, 128, 8
    $region5: #{tpu_custom_call.1} parent=1 // pred_fallthru
      _
    // Predicated region
    $region6: #{tpu_custom_call.1} parent=1 // pred_check
      _
    $region7: #{tpu_custom_call.1} parent=1 // pred_check_branch
      %25 = sbr.rel (0) target = $region9
    $region8: #{tpu_custom_call.1} parent=1 // pred_region
      %s27 = ssub.s32 64, 64
      %28 = vsyncadd [#allocation7], %s27
      %s30 = sshll.u32 [#allocation6], 4
      %s31 = int_to_ptr.vmem [resolvable:$true] %s30
      %33 = dma.hbm_to_vmem [thread:$0]  %s1, 64, %s31, [#allocation7]
    $region9: #{tpu_custom_call.1} parent=1 // pred_fallthru
      _
    // Predicated region
    $region10: #{tpu_custom_call.1} parent=1 // pred_check
      _
    $region11: #{tpu_custom_call.1} parent=1 // pred_check_branch
      %35 = sbr.rel (0) target = $region13
    $region12: #{tpu_custom_call.1} parent=1 // pred_region
      %s37 = ssub.s32 64, 64
      %38 = vsyncadd [#allocation7], %s37
      %s40 = sshll.u32 [#allocation8], 4
      %s41 = int_to_ptr.vmem [resolvable:$true] %s40
      %43 = dma.hbm_to_vmem [thread:$0]  %s2, 64, %s41, [#allocation7]
    $region13: #{tpu_custom_call.1} parent=1 // pred_fallthru
      _
    // Predicated region
    $region14: #{tpu_custom_call.1} parent=1 // pred_check
      _
    $region15: #{tpu_custom_call.1} parent=1 // pred_check_branch
      %45 = sbr.rel (0) target = $region17
    $region16: #{tpu_custom_call.1} parent=1 // pred_region
      _
    $region17: #{tpu_custom_call.1} parent=1 // pred_fallthru
      _
    // Predicated region
    $region18: #{tpu_custom_call.1} parent=1 // pred_check
      _
    $region19: #{tpu_custom_call.1} parent=1 // pred_check_branch
      %47 = sbr.rel (0) target = $region21
    $region20: #{tpu_custom_call.1} parent=1 // pred_region
      %48 = dma.done [#allocation4], 256
    $region21: #{tpu_custom_call.1} parent=1 // pred_fallthru
      _
    // Predicated region
    $region22: #{tpu_custom_call.1} parent=1 // pred_check
      _
    $region23: #{tpu_custom_call.1} parent=1 // pred_check_branch
      %50 = sbr.rel (0) target = $region25
    $region24: #{tpu_custom_call.1} parent=1 // pred_region
      %51 = dma.done [#allocation7], 64
    $region25: #{tpu_custom_call.1} parent=1 // pred_fallthru
      _
    // Predicated region
    $region26: #{tpu_custom_call.1} parent=1 // pred_check
      _
    $region27: #{tpu_custom_call.1} parent=1 // pred_check_branch
      %53 = sbr.rel (0) target = $region29
    $region28: #{tpu_custom_call.1} parent=1 // pred_region
      %54 = dma.done [#allocation7], 64
    $region29: #{tpu_custom_call.1} parent=1 // pred_fallthru
      _
    %v55 = vld [vmem:[#allocation8] sm:$0xf]
    %v56 = vld [vmem:[%s3] sm:$0xf]
    %v57 = vld [vmem:[#allocation6] ss:$2 sm:$0x3]
    %v58 = vlaneseq
    %v59 = vshrl.u32 %v58, 7
    %v60 = vsub.s32 0, %v59
    %v61 = vrot.slane %v57, %v60
    %v62 = vlaneseq
    %v63 = vshrl.u32 %v62, 7
    %v64 = vsub.s32 1, %v63
    %v65 = vrot.slane %v57, %v64
    %s66 = scalar_lea.vmem [#allocation6], 1
    %v67 = vld [vmem:[%s66] ss:$2 sm:$0x3]
    %v68 = vlaneseq
    %v69 = vshrl.u32 %v68, 7
    %v70 = vsub.s32 0, %v69
    %v71 = vrot.slane %v67, %v70
    %v72 = vlaneseq
    %v73 = vshrl.u32 %v72, 7
    %v74 = vsub.s32 1, %v73
    %v75 = vrot.slane %v67, %v74
    %vm76 = vcmp.eq.s32.totalorder %v61, 0
    %vm77 = vcmp.eq.s32.totalorder %v65, 0
    %vm78 = vcmp.eq.s32.totalorder %v61, 15
    %vm79 = vcmp.eq.s32.totalorder %v65, 15
    %vm80 = vcmp.eq.s32.totalorder %v71, 0
    %vm81 = vcmp.eq.s32.totalorder %v75, 0
    %vm82 = vcmp.eq.s32.totalorder %v71, 15
    %vm83 = vcmp.eq.s32.totalorder %v75, 15
    %v84 = vld [vmem:[#allocation3] sm:$0xff]
    %v86 = vcombine.high %v84, %v84
    %88 = vrot.lane.b32.xlu0 %v84, 1
    %v89 = vpop.permute.xlu0 %88
    %90 = vrot.lane.b32.xlu0 %v86, 1
    %v91 = vpop.permute.xlu0 %90
    %v92 = vlaneseq
    %v93 = vand.u32 %v92, 127
    %vm94 = vcmp.lt.s32.totalorder %v93, 1
    %v95 = vsel %vm94, %v89, %v91
    %v96 = vsel %vm94, %v91, %v89
    %97 = vrot.lane.b32.xlu0 %v84, 127
    %v98 = vpop.permute.xlu0 %97
    %99 = vrot.lane.b32.xlu0 %v86, 127
    %v100 = vpop.permute.xlu0 %99
    %vm101 = vcmp.lt.s32.totalorder %v93, 127
    %v102 = vsel %vm101, %v98, %v100
    %v103 = vsel %vm101, %v100, %v98
    %v104 = vsel %vm76, %v102, %v96
    %v105 = vsel %vm77, %v103, %v95
    %v106 = vsel %vm78, %v96, %v102
    %v107 = vsel %vm79, %v95, %v103
    %108 = vrot.lane.b32.xlu0 %v104, 16
    %v109 = vpop.permute.xlu0 %108
    %110 = vrot.lane.b32.xlu0 %v105, 16
    %v111 = vpop.permute.xlu0 %110
    %vm112 = vcmp.lt.s32.totalorder %v93, 16
    %v113 = vsel %vm112, %v109, %v111
    %v114 = vsel %vm112, %v111, %v109
    %115 = vrot.lane.b32.xlu0 %v104, 112
    %v116 = vpop.permute.xlu0 %115
    %117 = vrot.lane.b32.xlu0 %v105, 112
    %v118 = vpop.permute.xlu0 %117
    %vm119 = vcmp.lt.s32.totalorder %v93, 112
    %v120 = vsel %vm119, %v116, %v118
    %v121 = vsel %vm119, %v118, %v116
    %v122 = vsel %vm80, %v120, %v114
    %v123 = vsel %vm81, %v121, %v113
    %v124 = vsel %vm82, %v114, %v120
    %v125 = vsel %vm83, %v113, %v121
    %126 = vst [vmem:[#allocation2] sm:$0xf] %v122
    %127 = vst [vmem:[#allocation2 + $0x8] sm:$0xf] %v123
    %v130 = vrot.slane %v104, 4
    %v131 = vrot.slane %v105, 4
    %134 = vst [vmem:[#allocation2 + $0x10] sm:$0xf0] %v130
    %135 = vst [vmem:[#allocation2 + $0x18] sm:$0xf0] %v131
    %136 = vst [vmem:[#allocation2 + $0x30] sm:$0xf] %v124
    %137 = vst [vmem:[#allocation2 + $0x38] sm:$0xf] %v125
    %138 = vrot.lane.b32.xlu0 %v84, 16
    %v139 = vpop.permute.xlu0 %138
    %140 = vrot.lane.b32.xlu0 %v86, 16
    %v141 = vpop.permute.xlu0 %140
    %v142 = vsel %vm112, %v139, %v141
    %v143 = vsel %vm112, %v141, %v139
    %144 = vrot.lane.b32.xlu0 %v84, 112
    %v145 = vpop.permute.xlu0 %144
    %146 = vrot.lane.b32.xlu0 %v86, 112
    %v147 = vpop.permute.xlu0 %146
    %v148 = vsel %vm119, %v145, %v147
    %v149 = vsel %vm119, %v147, %v145
    %v150 = vsel %vm80, %v148, %v143
    %v151 = vsel %vm81, %v149, %v142
    %v152 = vsel %vm82, %v143, %v148
    %v153 = vsel %vm83, %v142, %v149
    %v156 = vrot.slane %v150, 4
    %v157 = vrot.slane %v151, 4
    %160 = vst [vmem:[#allocation2] sm:$0xf0] %v156
    %161 = vst [vmem:[#allocation2 + $0x8] sm:$0xf0] %v157
    %162 = vst [vmem:[#allocation2 + $0x20] sm:$0xf] %v84
    %163 = vst [vmem:[#allocation2 + $0x28] sm:$0xf] %v86
    %v166 = vrot.slane %v152, 4
    %v167 = vrot.slane %v153, 4
    %170 = vst [vmem:[#allocation2 + $0x30] sm:$0xf0] %v166
    %171 = vst [vmem:[#allocation2 + $0x38] sm:$0xf0] %v167
    %172 = vrot.lane.b32.xlu0 %v106, 16
    %v173 = vpop.permute.xlu0 %172
    %174 = vrot.lane.b32.xlu0 %v107, 16
    %v175 = vpop.permute.xlu0 %174
    %v176 = vsel %vm112, %v173, %v175
    %v177 = vsel %vm112, %v175, %v173
    %178 = vrot.lane.b32.xlu0 %v106, 112
    %v179 = vpop.permute.xlu0 %178
    %180 = vrot.lane.b32.xlu0 %v107, 112
    %v181 = vpop.permute.xlu0 %180
    %v182 = vsel %vm119, %v179, %v181
    %v183 = vsel %vm119, %v181, %v179
    %v184 = vsel %vm80, %v182, %v177
    %v185 = vsel %vm81, %v183, %v176
    %v186 = vsel %vm82, %v177, %v182
    %v187 = vsel %vm83, %v176, %v183
    %188 = vst [vmem:[#allocation2 + $0x10] sm:$0xf] %v184
    %189 = vst [vmem:[#allocation2 + $0x18] sm:$0xf] %v185
    %v192 = vrot.slane %v106, 4
    %v193 = vrot.slane %v107, 4
    %196 = vst [vmem:[#allocation2 + $0x20] sm:$0xf0] %v192
    %197 = vst [vmem:[#allocation2 + $0x28] sm:$0xf0] %v193
    %198 = vst [vmem:[#allocation2 + $0x40] sm:$0xf] %v186
    %199 = vst [vmem:[#allocation2 + $0x48] sm:$0xf] %v187
    %v200 = vld [vmem:[#allocation2] sm:$0xff]
    %v201 = vld [vmem:[#allocation2 + $0x8] sm:$0xff]
    %v202 = vld [vmem:[#allocation2 + $0x10] sm:$0xff]
    %v203 = vld [vmem:[#allocation2 + $0x18] sm:$0xff]
    %v204 = vld [vmem:[#allocation2 + $0x20] sm:$0xff]
    %v205 = vld [vmem:[#allocation2 + $0x28] sm:$0xff]
    %v206 = vld [vmem:[#allocation2 + $0x30] sm:$0xff]
    %v207 = vld [vmem:[#allocation2 + $0x38] sm:$0xff]
    %v208 = vld [vmem:[#allocation2 + $0x40] sm:$0xf]
    %v209 = vld [vmem:[#allocation2 + $0x48] sm:$0xf]
    %vm210 = vcmask 293888
    %v212 = vsel %vm210, %v55, 0
    %vm214 = vcmask 1043456
    %v216 = vsel %vm214, %v208, 0
    %v219 = vsel %vm214, %v209, 0
    %221 = vmatprep.subr.mxu0 0.0
    %222 = vmatpush1.msra.mxu0 0.0
    %223 = vmatprep.subr.mxu0 0.0
    %224 = vmatpush1.msra.mxu0 0.0
    %225 = vmatprep.subr.mxu0 0.0
    %226 = vmatpush1.msra.mxu0 0.0
    %227 = vmatprep.subr.mxu0 0.0
    %228 = vmatpush1.msra.mxu0 0.0
    %229 = vmatprep.subr.mxu0 0.0
    %230 = vmatpush1.msra.mxu0 0.0
    %231 = vmatprep.subr.mxu0 0.0
    %232 = vmatpush1.msra.mxu0 0.0
    %233 = vmatprep.subr.mxu0 0.0
    %234 = vmatpush1.msra.mxu0 0.0
    %235 = vmatprep.subr.mxu0 0.0
    %236 = vmatpush1.msra.mxu0 0.0
    %237 = vmatprep.subr.mxu0 0.0
    %238 = vmatpush1.msra.mxu0 0.0
    %239 = vmatprep.subr.mxu0 0.0
    %240 = vmatpush1.msra.mxu0 0.0
    %241 = vmatprep.subr.mxu0 0.0
    %242 = vmatpush1.msra.mxu0 0.0
    %243 = vmatprep.subr.mxu0 %v219
    %244 = vmatpush1.msra.mxu0 %v216
    %245 = vmatprep.subr.mxu0 %v207
    %246 = vmatpush1.msra.mxu0 %v206
    %247 = vmatprep.subr.mxu0 %v205
    %248 = vmatpush1.msra.mxu0 %v204
    %249 = vmatprep.subr.mxu0 %v203
    %250 = vmatpush1.msra.mxu0 %v202
    %251 = vmatprep.subr.mxu0 %v201
    %252 = vmatpush1.msra.mxu0 %v200
    %253 = vmatprep.subr.mxu0 0.0
    %254 = vmatpush2.msra.mxu0 0.0
    %255 = vmatprep.subr.mxu0 0.0
    %256 = vmatpush2.msra.mxu0 0.0
    %257 = vmatprep.subr.mxu0 0.0
    %258 = vmatpush2.msra.mxu0 0.0
    %259 = vmatprep.subr.mxu0 0.0
    %260 = vmatpush2.msra.mxu0 0.0
    %261 = vmatprep.subr.mxu0 0.0
    %262 = vmatpush2.msra.mxu0 0.0
    %263 = vmatprep.subr.mxu0 0.0
    %264 = vmatpush2.msra.mxu0 0.0
    %265 = vmatprep.subr.mxu0 0.0
    %266 = vmatpush2.msra.mxu0 0.0
    %267 = vmatprep.subr.mxu0 0.0
    %268 = vmatpush2.msra.mxu0 0.0
    %269 = vmatprep.subr.mxu0 0.0
    %270 = vmatpush2.msra.mxu0 0.0
    %271 = vmatprep.subr.mxu0 0.0
    %272 = vmatpush2.msra.mxu0 0.0
    %273 = vmatprep.subr.mxu0 0.0
    %274 = vmatpush2.msra.mxu0 0.0
    %275 = vmatprep.subr.mxu0 0.0
    %276 = vmatpush2.msra.mxu0 0.0
    %277 = vmatprep.subr.mxu0 0.0
    %278 = vmatpush2.msra.mxu0 0.0
    %279 = vmatprep.subr.mxu0 0.0
    %280 = vmatpush2.msra.mxu0 0.0
    %281 = vmatprep.subr.mxu0 0.0
    %282 = vmatpush2.msra.mxu0 0.0
    %283 = vmatprep.subr.mxu0 0.0
    %284 = vmatpush2.msra.mxu0 0.0
    %285 = vmatprep.mubr.f32.mxu0 0.0
    %286 = vmatmul.mubr.f32.gmra.mxu0 %v212
    %v287 = vpop.f32.mrf.mxu0
    %v288 = vadd.f32 0.0, %v287
    %v289 = vpop.f32.mrf.mxu0
    %v290 = vadd.f32 0.0, %v289
    %291 = vdwg.mxu0
    %v292 = vsel %vm214, %v288, 0.0
    %v293 = vsel %vm214, %v290, 0.0
    %v294 = vadd.f32 %v292, %v293
    %295 = vadd.xlane.f32.xlu0 %v294
    %v296 = vpop.xlane.xlu0 %295
    %v297 = vmul.f32 %v296, 0.00390625
    %v298 = vsub.f32 %v288, %v297
    %v299 = vsub.f32 %v290, %v297
    %v300 = vmul.f32 %v298, %v298
    %v301 = vmul.f32 %v299, %v299
    %v302 = vsel %vm214, %v300, 0.0
    %v303 = vsel %vm214, %v301, 0.0
    %v304 = vadd.f32 %v302, %v303
    %305 = vadd.xlane.f32.xlu0 %v304
    %v306 = vpop.xlane.xlu0 %305
    %v307 = vmul.f32 %v306, 0.00390625
    %v308 = vadd.f32 %v307, 1e-05
    %v309 = vrsqrt.pop %v308
    %v310 = vmul.f32 %v298, %v309
    %v311 = vmul.f32 %v299, %v309
    %v312 = vmax.f32 %v310, 0.0
    %v313 = vmax.f32 %v311, 0.0
    %314 = vrot.lane.b32.xlu0 %v312, 1
    %v315 = vpop.permute.xlu0 %314
    %316 = vrot.lane.b32.xlu0 %v313, 1
    %v317 = vpop.permute.xlu0 %316
    %v318 = vsel %vm94, %v315, %v317
    %v319 = vsel %vm94, %v317, %v315
    %320 = vrot.lane.b32.xlu0 %v312, 127
    %v321 = vpop.permute.xlu0 %320
    %322 = vrot.lane.b32.xlu0 %v313, 127
    %v323 = vpop.permute.xlu0 %322
    %v324 = vsel %vm101, %v321, %v323
    %v325 = vsel %vm101, %v323, %v321
    %v326 = vsel %vm76, %v324, %v319
    %v327 = vsel %vm77, %v325, %v318
    %v328 = vsel %vm78, %v319, %v324
    %v329 = vsel %vm79, %v318, %v325
    %330 = vrot.lane.b32.xlu0 %v326, 16
    %v331 = vpop.permute.xlu0 %330
    %332 = vrot.lane.b32.xlu0 %v327, 16
    %v333 = vpop.permute.xlu0 %332
    %v334 = vsel %vm112, %v331, %v333
    %v335 = vsel %vm112, %v333, %v331
    %336 = vrot.lane.b32.xlu0 %v326, 112
    %v337 = vpop.permute.xlu0 %336
    %338 = vrot.lane.b32.xlu0 %v327, 112
    %v339 = vpop.permute.xlu0 %338
    %v340 = vsel %vm119, %v337, %v339
    %v341 = vsel %vm119, %v339, %v337
    %v342 = vsel %vm80, %v340, %v335
    %v343 = vsel %vm81, %v341, %v334
    %v344 = vsel %vm82, %v335, %v340
    %v345 = vsel %vm83, %v334, %v341
    %346 = vst [vmem:[#allocation2] sm:$0xf] %v342
    %347 = vst [vmem:[#allocation2 + $0x8] sm:$0xf] %v343
    %v350 = vrot.slane %v326, 4
    %v351 = vrot.slane %v327, 4
    %354 = vst [vmem:[#allocation2 + $0x10] sm:$0xf0] %v350
    %355 = vst [vmem:[#allocation2 + $0x18] sm:$0xf0] %v351
    %356 = vst [vmem:[#allocation2 + $0x30] sm:$0xf] %v344
    %357 = vst [vmem:[#allocation2 + $0x38] sm:$0xf] %v345
    %358 = vrot.lane.b32.xlu0 %v312, 16
    %v359 = vpop.permute.xlu0 %358
    %360 = vrot.lane.b32.xlu0 %v313, 16
    %v361 = vpop.permute.xlu0 %360
    %v362 = vsel %vm112, %v359, %v361
    %v363 = vsel %vm112, %v361, %v359
    %364 = vrot.lane.b32.xlu0 %v312, 112
    %v365 = vpop.permute.xlu0 %364
    %366 = vrot.lane.b32.xlu0 %v313, 112
    %v367 = vpop.permute.xlu0 %366
    %v368 = vsel %vm119, %v365, %v367
    %v369 = vsel %vm119, %v367, %v365
    %v370 = vsel %vm80, %v368, %v363
    %v371 = vsel %vm81, %v369, %v362
    %v372 = vsel %vm82, %v363, %v368
    %v373 = vsel %vm83, %v362, %v369
    %v376 = vrot.slane %v370, 4
    %v377 = vrot.slane %v371, 4
    %380 = vst [vmem:[#allocation2] sm:$0xf0] %v376
    %381 = vst [vmem:[#allocation2 + $0x8] sm:$0xf0] %v377
    %382 = vst [vmem:[#allocation2 + $0x20] sm:$0xf] %v312
    %383 = vst [vmem:[#allocation2 + $0x28] sm:$0xf] %v313
    %v386 = vrot.slane %v372, 4
    %v387 = vrot.slane %v373, 4
    %390 = vst [vmem:[#allocation2 + $0x30] sm:$0xf0] %v386
    %391 = vst [vmem:[#allocation2 + $0x38] sm:$0xf0] %v387
    %392 = vrot.lane.b32.xlu0 %v328, 16
    %v393 = vpop.permute.xlu0 %392
    %394 = vrot.lane.b32.xlu0 %v329, 16
    %v395 = vpop.permute.xlu0 %394
    %v396 = vsel %vm112, %v393, %v395
    %v397 = vsel %vm112, %v395, %v393
    %398 = vrot.lane.b32.xlu0 %v328, 112
    %v399 = vpop.permute.xlu0 %398
    %400 = vrot.lane.b32.xlu0 %v329, 112
    %v401 = vpop.permute.xlu0 %400
    %v402 = vsel %vm119, %v399, %v401
    %v403 = vsel %vm119, %v401, %v399
    %v404 = vsel %vm80, %v402, %v397
    %v405 = vsel %vm81, %v403, %v396
    %v406 = vsel %vm82, %v397, %v402
    %v407 = vsel %vm83, %v396, %v403
    %408 = vst [vmem:[#allocation2 + $0x10] sm:$0xf] %v404
    %409 = vst [vmem:[#allocation2 + $0x18] sm:$0xf] %v405
    %v412 = vrot.slane %v328, 4
    %v413 = vrot.slane %v329, 4
    %416 = vst [vmem:[#allocation2 + $0x20] sm:$0xf0] %v412
    %417 = vst [vmem:[#allocation2 + $0x28] sm:$0xf0] %v413
    %418 = vst [vmem:[#allocation2 + $0x40] sm:$0xf] %v406
    %419 = vst [vmem:[#allocation2 + $0x48] sm:$0xf] %v407
    %v420 = vld [vmem:[#allocation2] sm:$0xff]
    %v421 = vld [vmem:[#allocation2 + $0x8] sm:$0xff]
    %v422 = vld [vmem:[#allocation2 + $0x10] sm:$0xff]
    %v423 = vld [vmem:[#allocation2 + $0x18] sm:$0xff]
    %v424 = vld [vmem:[#allocation2 + $0x20] sm:$0xff]
    %v425 = vld [vmem:[#allocation2 + $0x28] sm:$0xff]
    %v426 = vld [vmem:[#allocation2 + $0x30] sm:$0xff]
    %v427 = vld [vmem:[#allocation2 + $0x38] sm:$0xff]
    %v428 = vld [vmem:[#allocation2 + $0x40] sm:$0xf]
    %v429 = vld [vmem:[#allocation2 + $0x48] sm:$0xf]
    %v431 = vsel %vm210, %v56, 0
    %v434 = vsel %vm214, %v428, 0
    %v437 = vsel %vm214, %v429, 0
    %439 = vmatprep.subr.mxu0 0.0
    %440 = vmatpush1.msra.mxu0 0.0
    %441 = vmatprep.subr.mxu0 0.0
    %442 = vmatpush1.msra.mxu0 0.0
    %443 = vmatprep.subr.mxu0 0.0
    %444 = vmatpush1.msra.mxu0 0.0
    %445 = vmatprep.subr.mxu0 0.0
    %446 = vmatpush1.msra.mxu0 0.0
    %447 = vmatprep.subr.mxu0 0.0
    %448 = vmatpush1.msra.mxu0 0.0
    %449 = vmatprep.subr.mxu0 0.0
    %450 = vmatpush1.msra.mxu0 0.0
    %451 = vmatprep.subr.mxu0 0.0
    %452 = vmatpush1.msra.mxu0 0.0
    %453 = vmatprep.subr.mxu0 0.0
    %454 = vmatpush1.msra.mxu0 0.0
    %455 = vmatprep.subr.mxu0 0.0
    %456 = vmatpush1.msra.mxu0 0.0
    %457 = vmatprep.subr.mxu0 0.0
    %458 = vmatpush1.msra.mxu0 0.0
    %459 = vmatprep.subr.mxu0 0.0
    %460 = vmatpush1.msra.mxu0 0.0
    %461 = vmatprep.subr.mxu0 %v437
    %462 = vmatpush1.msra.mxu0 %v434
    %463 = vmatprep.subr.mxu0 %v427
    %464 = vmatpush1.msra.mxu0 %v426
    %465 = vmatprep.subr.mxu0 %v425
    %466 = vmatpush1.msra.mxu0 %v424
    %467 = vmatprep.subr.mxu0 %v423
    %468 = vmatpush1.msra.mxu0 %v422
    %469 = vmatprep.subr.mxu0 %v421
    %470 = vmatpush1.msra.mxu0 %v420
    %471 = vmatprep.subr.mxu0 0.0
    %472 = vmatpush2.msra.mxu0 0.0
    %473 = vmatprep.subr.mxu0 0.0
    %474 = vmatpush2.msra.mxu0 0.0
    %475 = vmatprep.subr.mxu0 0.0
    %476 = vmatpush2.msra.mxu0 0.0
    %477 = vmatprep.subr.mxu0 0.0
    %478 = vmatpush2.msra.mxu0 0.0
    %479 = vmatprep.subr.mxu0 0.0
    %480 = vmatpush2.msra.mxu0 0.0
    %481 = vmatprep.subr.mxu0 0.0
    %482 = vmatpush2.msra.mxu0 0.0
    %483 = vmatprep.subr.mxu0 0.0
    %484 = vmatpush2.msra.mxu0 0.0
    %485 = vmatprep.subr.mxu0 0.0
    %486 = vmatpush2.msra.mxu0 0.0
    %487 = vmatprep.subr.mxu0 0.0
    %488 = vmatpush2.msra.mxu0 0.0
    %489 = vmatprep.subr.mxu0 0.0
    %490 = vmatpush2.msra.mxu0 0.0
    %491 = vmatprep.subr.mxu0 0.0
    %492 = vmatpush2.msra.mxu0 0.0
    %493 = vmatprep.subr.mxu0 0.0
    %494 = vmatpush2.msra.mxu0 0.0
    %495 = vmatprep.subr.mxu0 0.0
    %496 = vmatpush2.msra.mxu0 0.0
    %497 = vmatprep.subr.mxu0 0.0
    %498 = vmatpush2.msra.mxu0 0.0
    %499 = vmatprep.subr.mxu0 0.0
    %500 = vmatpush2.msra.mxu0 0.0
    %501 = vmatprep.subr.mxu0 0.0
    %502 = vmatpush2.msra.mxu0 0.0
    %503 = vmatprep.mubr.f32.mxu0 0.0
    %504 = vmatmul.mubr.f32.gmra.mxu0 %v431
    %v505 = vpop.f32.mrf.mxu0
    %v506 = vadd.f32 0.0, %v505
    %v507 = vpop.f32.mrf.mxu0
    %v508 = vadd.f32 0.0, %v507
    %509 = vdwg.mxu0
    %v510 = vsel %vm214, %v506, 0.0
    %v511 = vsel %vm214, %v508, 0.0
    %v512 = vadd.f32 %v510, %v511
    %513 = vadd.xlane.f32.xlu0 %v512
    %v514 = vpop.xlane.xlu0 %513
    %v515 = vmul.f32 %v514, 0.00390625
    %v516 = vsub.f32 %v506, %v515
    %v517 = vsub.f32 %v508, %v515
    %v518 = vmul.f32 %v516, %v516
    %v519 = vmul.f32 %v517, %v517
    %v520 = vsel %vm214, %v518, 0.0
    %v521 = vsel %vm214, %v519, 0.0
    %v522 = vadd.f32 %v520, %v521
    %523 = vadd.xlane.f32.xlu0 %v522
    %v524 = vpop.xlane.xlu0 %523
    %v525 = vmul.f32 %v524, 0.00390625
    %v526 = vadd.f32 %v525, 1e-05
    %v527 = vrsqrt.pop %v526
    %v528 = vmul.f32 %v516, %v527
    %v529 = vmul.f32 %v517, %v527
    %v532 = vcombine.low %v528, %v529
    %v534 = vadd.f32 %v84, %v532
    %535 = vst [vmem:[#allocation9] sm:$0xff] %v534
    %s536 = scalar_lea.vmem [#allocation3], 8
    %v537 = vld [vmem:[%s536] sm:$0xff]
    %v539 = vcombine.high %v537, %v537
    %541 = vrot.lane.b32.xlu0 %v537, 1
    %v542 = vpop.permute.xlu0 %541
    %543 = vrot.lane.b32.xlu0 %v539, 1
    %v544 = vpop.permute.xlu0 %543
    %v545 = vsel %vm94, %v542, %v544
    %v546 = vsel %vm94, %v544, %v542
    %547 = vrot.lane.b32.xlu0 %v537, 127
    %v548 = vpop.permute.xlu0 %547
    %549 = vrot.lane.b32.xlu0 %v539, 127
    %v550 = vpop.permute.xlu0 %549
    %v551 = vsel %vm101, %v548, %v550
    %v552 = vsel %vm101, %v550, %v548
    %v553 = vsel %vm76, %v551, %v546
    %v554 = vsel %vm77, %v552, %v545
    %v555 = vsel %vm78, %v546, %v551
    %v556 = vsel %vm79, %v545, %v552
    %557 = vrot.lane.b32.xlu0 %v553, 16
    %v558 = vpop.permute.xlu0 %557
    %559 = vrot.lane.b32.xlu0 %v554, 16
    %v560 = vpop.permute.xlu0 %559
    %v561 = vsel %vm112, %v558, %v560
    %v562 = vsel %vm112, %v560, %v558
    %563 = vrot.lane.b32.xlu0 %v553, 112
    %v564 = vpop.permute.xlu0 %563
    %565 = vrot.lane.b32.xlu0 %v554, 112
    %v566 = vpop.permute.xlu0 %565
    %v567 = vsel %vm119, %v564, %v566
    %v568 = vsel %vm119, %v566, %v564
    %v569 = vsel %vm80, %v567, %v562
    %v570 = vsel %vm81, %v568, %v561
    %v571 = vsel %vm82, %v562, %v567
    %v572 = vsel %vm83, %v561, %v568
    %573 = vst [vmem:[#allocation2] sm:$0xf] %v569
    %574 = vst [vmem:[#allocation2 + $0x8] sm:$0xf] %v570
    %v577 = vrot.slane %v553, 4
    %v578 = vrot.slane %v554, 4
    %581 = vst [vmem:[#allocation2 + $0x10] sm:$0xf0] %v577
    %582 = vst [vmem:[#allocation2 + $0x18] sm:$0xf0] %v578
    %583 = vst [vmem:[#allocation2 + $0x30] sm:$0xf] %v571
    %584 = vst [vmem:[#allocation2 + $0x38] sm:$0xf] %v572
    %585 = vrot.lane.b32.xlu0 %v537, 16
    %v586 = vpop.permute.xlu0 %585
    %587 = vrot.lane.b32.xlu0 %v539, 16
    %v588 = vpop.permute.xlu0 %587
    %v589 = vsel %vm112, %v586, %v588
    %v590 = vsel %vm112, %v588, %v586
    %591 = vrot.lane.b32.xlu0 %v537, 112
    %v592 = vpop.permute.xlu0 %591
    %593 = vrot.lane.b32.xlu0 %v539, 112
    %v594 = vpop.permute.xlu0 %593
    %v595 = vsel %vm119, %v592, %v594
    %v596 = vsel %vm119, %v594, %v592
    %v597 = vsel %vm80, %v595, %v590
    %v598 = vsel %vm81, %v596, %v589
    %v599 = vsel %vm82, %v590, %v595
    %v600 = vsel %vm83, %v589, %v596
    %v603 = vrot.slane %v597, 4
    %v604 = vrot.slane %v598, 4
    %607 = vst [vmem:[#allocation2] sm:$0xf0] %v603
    %608 = vst [vmem:[#allocation2 + $0x8] sm:$0xf0] %v604
    %609 = vst [vmem:[#allocation2 + $0x20] sm:$0xf] %v537
    %610 = vst [vmem:[#allocation2 + $0x28] sm:$0xf] %v539
    %v613 = vrot.slane %v599, 4
    %v614 = vrot.slane %v600, 4
    %617 = vst [vmem:[#allocation2 + $0x30] sm:$0xf0] %v613
    %618 = vst [vmem:[#allocation2 + $0x38] sm:$0xf0] %v614
    %619 = vrot.lane.b32.xlu0 %v555, 16
    %v620 = vpop.permute.xlu0 %619
    %621 = vrot.lane.b32.xlu0 %v556, 16
    %v622 = vpop.permute.xlu0 %621
    %v623 = vsel %vm112, %v620, %v622
    %v624 = vsel %vm112, %v622, %v620
    %625 = vrot.lane.b32.xlu0 %v555, 112
    %v626 = vpop.permute.xlu0 %625
    %627 = vrot.lane.b32.xlu0 %v556, 112
    %v628 = vpop.permute.xlu0 %627
    %v629 = vsel %vm119, %v626, %v628
    %v630 = vsel %vm119, %v628, %v626
    %v631 = vsel %vm80, %v629, %v624
    %v632 = vsel %vm81, %v630, %v623
    %v633 = vsel %vm82, %v624, %v629
    %v634 = vsel %vm83, %v623, %v630
    %635 = vst [vmem:[#allocation2 + $0x10] sm:$0xf] %v631
    %636 = vst [vmem:[#allocation2 + $0x18] sm:$0xf] %v632
    %v639 = vrot.slane %v555, 4
    %v640 = vrot.slane %v556, 4
    %643 = vst [vmem:[#allocation2 + $0x20] sm:$0xf0] %v639
    %644 = vst [vmem:[#allocation2 + $0x28] sm:$0xf0] %v640
    %645 = vst [vmem:[#allocation2 + $0x40] sm:$0xf] %v633
    %646 = vst [vmem:[#allocation2 + $0x48] sm:$0xf] %v634
    %v647 = vld [vmem:[#allocation2] sm:$0xff]
    %v648 = vld [vmem:[#allocation2 + $0x8] sm:$0xff]
    %v649 = vld [vmem:[#allocation2 + $0x10] sm:$0xff]
    %v650 = vld [vmem:[#allocation2 + $0x18] sm:$0xff]
    %v651 = vld [vmem:[#allocation2 + $0x20] sm:$0xff]
    %v652 = vld [vmem:[#allocation2 + $0x28] sm:$0xff]
    %v653 = vld [vmem:[#allocation2 + $0x30] sm:$0xff]
    %v654 = vld [vmem:[#allocation2 + $0x38] sm:$0xff]
    %v655 = vld [vmem:[#allocation2 + $0x40] sm:$0xf]
    %v656 = vld [vmem:[#allocation2 + $0x48] sm:$0xf]
    %v658 = vsel %vm214, %v655, 0
    %v661 = vsel %vm214, %v656, 0
    %663 = vmatprep.subr.mxu0 0.0
    %664 = vmatpush1.msra.mxu0 0.0
    %665 = vmatprep.subr.mxu0 0.0
    %666 = vmatpush1.msra.mxu0 0.0
    %667 = vmatprep.subr.mxu0 0.0
    %668 = vmatpush1.msra.mxu0 0.0
    %669 = vmatprep.subr.mxu0 0.0
    %670 = vmatpush1.msra.mxu0 0.0
    %671 = vmatprep.subr.mxu0 0.0
    %672 = vmatpush1.msra.mxu0 0.0
    %673 = vmatprep.subr.mxu0 0.0
    %674 = vmatpush1.msra.mxu0 0.0
    %675 = vmatprep.subr.mxu0 0.0
    %676 = vmatpush1.msra.mxu0 0.0
    %677 = vmatprep.subr.mxu0 0.0
    %678 = vmatpush1.msra.mxu0 0.0
    %679 = vmatprep.subr.mxu0 0.0
    %680 = vmatpush1.msra.mxu0 0.0
    %681 = vmatprep.subr.mxu0 0.0
    %682 = vmatpush1.msra.mxu0 0.0
    %683 = vmatprep.subr.mxu0 0.0
    %684 = vmatpush1.msra.mxu0 0.0
    %685 = vmatprep.subr.mxu0 %v661
    %686 = vmatpush1.msra.mxu0 %v658
    %687 = vmatprep.subr.mxu0 %v654
    %688 = vmatpush1.msra.mxu0 %v653
    %689 = vmatprep.subr.mxu0 %v652
    %690 = vmatpush1.msra.mxu0 %v651
    %691 = vmatprep.subr.mxu0 %v650
    %692 = vmatpush1.msra.mxu0 %v649
    %693 = vmatprep.subr.mxu0 %v648
    %694 = vmatpush1.msra.mxu0 %v647
    %695 = vmatprep.subr.mxu0 0.0
    %696 = vmatpush2.msra.mxu0 0.0
    %697 = vmatprep.subr.mxu0 0.0
    %698 = vmatpush2.msra.mxu0 0.0
    %699 = vmatprep.subr.mxu0 0.0
    %700 = vmatpush2.msra.mxu0 0.0
    %701 = vmatprep.subr.mxu0 0.0
    %702 = vmatpush2.msra.mxu0 0.0
    %703 = vmatprep.subr.mxu0 0.0
    %704 = vmatpush2.msra.mxu0 0.0
    %705 = vmatprep.subr.mxu0 0.0
    %706 = vmatpush2.msra.mxu0 0.0
    %707 = vmatprep.subr.mxu0 0.0
    %708 = vmatpush2.msra.mxu0 0.0
    %709 = vmatprep.subr.mxu0 0.0
    %710 = vmatpush2.msra.mxu0 0.0
    %711 = vmatprep.subr.mxu0 0.0
    %712 = vmatpush2.msra.mxu0 0.0
    %713 = vmatprep.subr.mxu0 0.0
    %714 = vmatpush2.msra.mxu0 0.0
    %715 = vmatprep.subr.mxu0 0.0
    %716 = vmatpush2.msra.mxu0 0.0
    %717 = vmatprep.subr.mxu0 0.0
    %718 = vmatpush2.msra.mxu0 0.0
    %719 = vmatprep.subr.mxu0 0.0
    %720 = vmatpush2.msra.mxu0 0.0
    %721 = vmatprep.subr.mxu0 0.0
    %722 = vmatpush2.msra.mxu0 0.0
    %723 = vmatprep.subr.mxu0 0.0
    %724 = vmatpush2.msra.mxu0 0.0
    %725 = vmatprep.subr.mxu0 0.0
    %726 = vmatpush2.msra.mxu0 0.0
    %727 = vmatprep.mubr.f32.mxu0 0.0
    %728 = vmatmul.mubr.f32.gmra.mxu0 %v212
    %v729 = vpop.f32.mrf.mxu0
    %v730 = vadd.f32 0.0, %v729
    %v731 = vpop.f32.mrf.mxu0
    %v732 = vadd.f32 0.0, %v731
    %733 = vdwg.mxu0
    %v734 = vsel %vm214, %v730, 0.0
    %v735 = vsel %vm214, %v732, 0.0
    %v736 = vadd.f32 %v734, %v735
    %737 = vadd.xlane.f32.xlu0 %v736
    %v738 = vpop.xlane.xlu0 %737
    %v739 = vmul.f32 %v738, 0.00390625
    %v740 = vsub.f32 %v730, %v739
    %v741 = vsub.f32 %v732, %v739
    %v742 = vmul.f32 %v740, %v740
    %v743 = vmul.f32 %v741, %v741
    %v744 = vsel %vm214, %v742, 0.0
    %v745 = vsel %vm214, %v743, 0.0
    %v746 = vadd.f32 %v744, %v745
    %747 = vadd.xlane.f32.xlu0 %v746
    %v748 = vpop.xlane.xlu0 %747
    %v749 = vmul.f32 %v748, 0.00390625
    %v750 = vadd.f32 %v749, 1e-05
    %v751 = vrsqrt.pop %v750
    %v752 = vmul.f32 %v740, %v751
    %v753 = vmul.f32 %v741, %v751
    %v754 = vmax.f32 %v752, 0.0
    %v755 = vmax.f32 %v753, 0.0
    %756 = vrot.lane.b32.xlu0 %v754, 1
    %v757 = vpop.permute.xlu0 %756
    %758 = vrot.lane.b32.xlu0 %v755, 1
    %v759 = vpop.permute.xlu0 %758
    %v760 = vsel %vm94, %v757, %v759
    %v761 = vsel %vm94, %v759, %v757
    %762 = vrot.lane.b32.xlu0 %v754, 127
    %v763 = vpop.permute.xlu0 %762
    %764 = vrot.lane.b32.xlu0 %v755, 127
    %v765 = vpop.permute.xlu0 %764
    %v766 = vsel %vm101, %v763, %v765
    %v767 = vsel %vm101, %v765, %v763
    %v768 = vsel %vm76, %v766, %v761
    %v769 = vsel %vm77, %v767, %v760
    %v770 = vsel %vm78, %v761, %v766
    %v771 = vsel %vm79, %v760, %v767
    %772 = vrot.lane.b32.xlu0 %v768, 16
    %v773 = vpop.permute.xlu0 %772
    %774 = vrot.lane.b32.xlu0 %v769, 16
    %v775 = vpop.permute.xlu0 %774
    %v776 = vsel %vm112, %v773, %v775
    %v777 = vsel %vm112, %v775, %v773
    %778 = vrot.lane.b32.xlu0 %v768, 112
    %v779 = vpop.permute.xlu0 %778
    %780 = vrot.lane.b32.xlu0 %v769, 112
    %v781 = vpop.permute.xlu0 %780
    %v782 = vsel %vm119, %v779, %v781
    %v783 = vsel %vm119, %v781, %v779
    %v784 = vsel %vm80, %v782, %v777
    %v785 = vsel %vm81, %v783, %v776
    %v786 = vsel %vm82, %v777, %v782
    %v787 = vsel %vm83, %v776, %v783
    %788 = vst [vmem:[#allocation2] sm:$0xf] %v784
    %789 = vst [vmem:[#allocation2 + $0x8] sm:$0xf] %v785
    %v792 = vrot.slane %v768, 4
    %v793 = vrot.slane %v769, 4
    %796 = vst [vmem:[#allocation2 + $0x10] sm:$0xf0] %v792
    %797 = vst [vmem:[#allocation2 + $0x18] sm:$0xf0] %v793
    %798 = vst [vmem:[#allocation2 + $0x30] sm:$0xf] %v786
    %799 = vst [vmem:[#allocation2 + $0x38] sm:$0xf] %v787
    %800 = vrot.lane.b32.xlu0 %v754, 16
    %v801 = vpop.permute.xlu0 %800
    %802 = vrot.lane.b32.xlu0 %v755, 16
    %v803 = vpop.permute.xlu0 %802
    %v804 = vsel %vm112, %v801, %v803
    %v805 = vsel %vm112, %v803, %v801
    %806 = vrot.lane.b32.xlu0 %v754, 112
    %v807 = vpop.permute.xlu0 %806
    %808 = vrot.lane.b32.xlu0 %v755, 112
    %v809 = vpop.permute.xlu0 %808
    %v810 = vsel %vm119, %v807, %v809
    %v811 = vsel %vm119, %v809, %v807
    %v812 = vsel %vm80, %v810, %v805
    %v813 = vsel %vm81, %v811, %v804
    %v814 = vsel %vm82, %v805, %v810
    %v815 = vsel %vm83, %v804, %v811
    %v818 = vrot.slane %v812, 4
    %v819 = vrot.slane %v813, 4
    %822 = vst [vmem:[#allocation2] sm:$0xf0] %v818
    %823 = vst [vmem:[#allocation2 + $0x8] sm:$0xf0] %v819
    %824 = vst [vmem:[#allocation2 + $0x20] sm:$0xf] %v754
    %825 = vst [vmem:[#allocation2 + $0x28] sm:$0xf] %v755
    %v828 = vrot.slane %v814, 4
    %v829 = vrot.slane %v815, 4
    %832 = vst [vmem:[#allocation2 + $0x30] sm:$0xf0] %v828
    %833 = vst [vmem:[#allocation2 + $0x38] sm:$0xf0] %v829
    %834 = vrot.lane.b32.xlu0 %v770, 16
    %v835 = vpop.permute.xlu0 %834
    %836 = vrot.lane.b32.xlu0 %v771, 16
    %v837 = vpop.permute.xlu0 %836
    %v838 = vsel %vm112, %v835, %v837
    %v839 = vsel %vm112, %v837, %v835
    %840 = vrot.lane.b32.xlu0 %v770, 112
    %v841 = vpop.permute.xlu0 %840
    %842 = vrot.lane.b32.xlu0 %v771, 112
    %v843 = vpop.permute.xlu0 %842
    %v844 = vsel %vm119, %v841, %v843
    %v845 = vsel %vm119, %v843, %v841
    %v846 = vsel %vm80, %v844, %v839
    %v847 = vsel %vm81, %v845, %v838
    %v848 = vsel %vm82, %v839, %v844
    %v849 = vsel %vm83, %v838, %v845
    %850 = vst [vmem:[#allocation2 + $0x10] sm:$0xf] %v846
    %851 = vst [vmem:[#allocation2 + $0x18] sm:$0xf] %v847
    %v854 = vrot.slane %v770, 4
    %v855 = vrot.slane %v771, 4
    %858 = vst [vmem:[#allocation2 + $0x20] sm:$0xf0] %v854
    %859 = vst [vmem:[#allocation2 + $0x28] sm:$0xf0] %v855
    %860 = vst [vmem:[#allocation2 + $0x40] sm:$0xf] %v848
    %861 = vst [vmem:[#allocation2 + $0x48] sm:$0xf] %v849
    %v862 = vld [vmem:[#allocation2] sm:$0xff]
    %v863 = vld [vmem:[#allocation2 + $0x8] sm:$0xff]
    %v864 = vld [vmem:[#allocation2 + $0x10] sm:$0xff]
    %v865 = vld [vmem:[#allocation2 + $0x18] sm:$0xff]
    %v866 = vld [vmem:[#allocation2 + $0x20] sm:$0xff]
    %v867 = vld [vmem:[#allocation2 + $0x28] sm:$0xff]
    %v868 = vld [vmem:[#allocation2 + $0x30] sm:$0xff]
    %v869 = vld [vmem:[#allocation2 + $0x38] sm:$0xff]
    %v870 = vld [vmem:[#allocation2 + $0x40] sm:$0xf]
    %v871 = vld [vmem:[#allocation2 + $0x48] sm:$0xf]
    %v873 = vsel %vm214, %v870, 0
    %v876 = vsel %vm214, %v871, 0
    %878 = vmatprep.subr.mxu0 0.0
    %879 = vmatpush1.msra.mxu0 0.0
    %880 = vmatprep.subr.mxu0 0.0
    %881 = vmatpush1.msra.mxu0 0.0
    %882 = vmatprep.subr.mxu0 0.0
    %883 = vmatpush1.msra.mxu0 0.0
    %884 = vmatprep.subr.mxu0 0.0
    %885 = vmatpush1.msra.mxu0 0.0
    %886 = vmatprep.subr.mxu0 0.0
    %887 = vmatpush1.msra.mxu0 0.0
    %888 = vmatprep.subr.mxu0 0.0
    %889 = vmatpush1.msra.mxu0 0.0
    %890 = vmatprep.subr.mxu0 0.0
    %891 = vmatpush1.msra.mxu0 0.0
    %892 = vmatprep.subr.mxu0 0.0
    %893 = vmatpush1.msra.mxu0 0.0
    %894 = vmatprep.subr.mxu0 0.0
    %895 = vmatpush1.msra.mxu0 0.0
    %896 = vmatprep.subr.mxu0 0.0
    %897 = vmatpush1.msra.mxu0 0.0
    %898 = vmatprep.subr.mxu0 0.0
    %899 = vmatpush1.msra.mxu0 0.0
    %900 = vmatprep.subr.mxu0 %v876
    %901 = vmatpush1.msra.mxu0 %v873
    %902 = vmatprep.subr.mxu0 %v869
    %903 = vmatpush1.msra.mxu0 %v868
    %904 = vmatprep.subr.mxu0 %v867
    %905 = vmatpush1.msra.mxu0 %v866
    %906 = vmatprep.subr.mxu0 %v865
    %907 = vmatpush1.msra.mxu0 %v864
    %908 = vmatprep.subr.mxu0 %v863
    %909 = vmatpush1.msra.mxu0 %v862
    %910 = vmatprep.subr.mxu0 0.0
    %911 = vmatpush2.msra.mxu0 0.0
    %912 = vmatprep.subr.mxu0 0.0
    %913 = vmatpush2.msra.mxu0 0.0
    %914 = vmatprep.subr.mxu0 0.0
    %915 = vmatpush2.msra.mxu0 0.0
    %916 = vmatprep.subr.mxu0 0.0
    %917 = vmatpush2.msra.mxu0 0.0
    %918 = vmatprep.subr.mxu0 0.0
    %919 = vmatpush2.msra.mxu0 0.0
    %920 = vmatprep.subr.mxu0 0.0
    %921 = vmatpush2.msra.mxu0 0.0
    %922 = vmatprep.subr.mxu0 0.0
    %923 = vmatpush2.msra.mxu0 0.0
    %924 = vmatprep.subr.mxu0 0.0
    %925 = vmatpush2.msra.mxu0 0.0
    %926 = vmatprep.subr.mxu0 0.0
    %927 = vmatpush2.msra.mxu0 0.0
    %928 = vmatprep.subr.mxu0 0.0
    %929 = vmatpush2.msra.mxu0 0.0
    %930 = vmatprep.subr.mxu0 0.0
    %931 = vmatpush2.msra.mxu0 0.0
    %932 = vmatprep.subr.mxu0 0.0
    %933 = vmatpush2.msra.mxu0 0.0
    %934 = vmatprep.subr.mxu0 0.0
    %935 = vmatpush2.msra.mxu0 0.0
    %936 = vmatprep.subr.mxu0 0.0
    %937 = vmatpush2.msra.mxu0 0.0
    %938 = vmatprep.subr.mxu0 0.0
    %939 = vmatpush2.msra.mxu0 0.0
    %940 = vmatprep.subr.mxu0 0.0
    %941 = vmatpush2.msra.mxu0 0.0
    %942 = vmatprep.mubr.f32.mxu0 0.0
    %943 = vmatmul.mubr.f32.gmra.mxu0 %v431
    %v944 = vpop.f32.mrf.mxu0
    %v945 = vadd.f32 0.0, %v944
    %v946 = vpop.f32.mrf.mxu0
    %v947 = vadd.f32 0.0, %v946
    %948 = vdwg.mxu0
    %v949 = vsel %vm214, %v945, 0.0
    %v950 = vsel %vm214, %v947, 0.0
    %v951 = vadd.f32 %v949, %v950
    %952 = vadd.xlane.f32.xlu0 %v951
    %v953 = vpop.xlane.xlu0 %952
    %v954 = vmul.f32 %v953, 0.00390625
    %v955 = vsub.f32 %v945, %v954
    %v956 = vsub.f32 %v947, %v954
    %v957 = vmul.f32 %v955, %v955
    %v958 = vmul.f32 %v956, %v956
    %v959 = vsel %vm214, %v957, 0.0
    %v960 = vsel %vm214, %v958, 0.0
    %v961 = vadd.f32 %v959, %v960
    %962 = vadd.xlane.f32.xlu0 %v961
    %v963 = vpop.xlane.xlu0 %962
    %v964 = vmul.f32 %v963, 0.00390625
    %v965 = vadd.f32 %v964, 1e-05
    %v966 = vrsqrt.pop %v965
    %v967 = vmul.f32 %v955, %v966
    %v968 = vmul.f32 %v956, %v966
    %v971 = vcombine.low %v967, %v968
    %v973 = vadd.f32 %v537, %v971
    %s974 = scalar_lea.vmem [#allocation9], 8
    %975 = vst [vmem:[%s974] sm:$0xff] %v973
    // Predicated region
    $region30: #{tpu_custom_call.1} parent=1 // pred_check
      _
    $region31: #{tpu_custom_call.1} parent=1 // pred_check_branch
      %977 = sbr.rel (0) target = $region33
    $region32: #{tpu_custom_call.1} parent=1 // pred_region
      %s979 = ssub.s32 256, 256
      %980 = vsyncadd [#allocation5], %s979
      %s981 = sshll.u32 [#allocation9], 4
      %s982 = int_to_ptr.vmem [resolvable:$true] %s981
      %987 = dma.vmem_to_hbm [thread:$0]  %s982, 256, %s4, [#allocation5], 128, 128, 8
    $region33: #{tpu_custom_call.1} parent=1 // pred_fallthru
      _
    // Predicated region
    $region34: #{tpu_custom_call.1} parent=1 // pred_check
      _
    $region35: #{tpu_custom_call.1} parent=1 // pred_check_branch
      %989 = sbr.rel (0) target = $region37
    $region36: #{tpu_custom_call.1} parent=1 // pred_region
      %990 = dma.done [#allocation5], 256
    $region37: #{tpu_custom_call.1} parent=1 // pred_fallthru
      _
    %991 = vsyncpa [#allocation4], 1
    %992 = vsyncpa [#allocation7], 1
    %993 = vsyncpa [#allocation5], 1

</llo_original>
